<compile_context>
chip_gen: v7x
topology: tpu7x:2x2x1
jax: 0.10.0
libtpu: 0.0.40
codegen_flags: <defaults>
</compile_context>

<pallas_src>
import functools
import math

import jax
import jax.numpy as jnp
import numpy as np
from jax import lax
from jax.experimental import pallas as pl
from jax.experimental.pallas import tpu as pltpu

EPS = 1e-5
_PREC = jax.lax.Precision.HIGHEST
_SUB = 8      # sublane tile
_LANE = 128   # lane tile


def _round_up(n, m):
    return (n + m - 1) // m * m


def _instance_norm_relu(y):
    # y: (C, S).  InstanceNorm2d defaults: affine=False, eps=1e-5, biased variance
    # over the spatial axis, per channel (per sample: one batch element per step).
    m = jnp.mean(y, axis=1, keepdims=True)
    var = jnp.mean(jnp.square(y - m), axis=1, keepdims=True)
    return jnp.maximum((y - m) * lax.rsqrt(var + EPS), 0.0)


def _conv_same(x, wmat, pad_ref, *, H, W, ker, pad):
    """'same' ker x ker conv (stride 1, zero pad ker//2, no bias) on a flat tile.

    x:       (C, S) activations, S = H*W (lanes = spatial, channels = sublanes).
    wmat:    (Cout, ker*ker*C) packed weights, columns ordered (ky, kx, c).
    pad_ref: VMEM scratch of at least (C, S + 2*pad) — flat zero-padded staging.
    Returns (Cout, S) float32.
    """
    C, S = x.shape
    r = ker // 2

    # Stage the tile in the (lane-aligned) middle of a zeroed flat buffer.
    pad_ref[...] = jnp.zeros_like(pad_ref)
    pad_ref[0:C, pad:pad + S] = x

    # Column index of each flattened pixel, to mask horizontal wrap-around.
    col = lax.broadcasted_iota(jnp.int32, (1, S), 1) % W

    taps = []
    for ky in range(ker):
        for kx in range(ker):
            dy, dx = ky - r, kx - r
            start = pad + dy * W + dx                    # static offset
            sl = pad_ref[0:C, start:start + S]           # (C, S) shifted view
            if dx != 0:
                valid = jnp.logical_and(col + dx >= 0, col + dx < W)
                sl = jnp.where(valid, sl, 0.0)
            taps.append(sl)

    patches = jnp.concatenate(taps, axis=0)              # (ker*ker*C, S)
    return jnp.dot(wmat, patches,
                   preferred_element_type=jnp.float32, precision=_PREC)


def _double_conv_kernel(x_ref, w1_ref, w2_ref, o_ref, pad_ref, *, H, W, ker, pad):
    # One batch element per grid step; all intermediates stay in VMEM/vregs.
    y = _conv_same(x_ref[...], w1_ref[...], pad_ref, H=H, W=W, ker=ker, pad=pad)
    y = _instance_norm_relu(y)
    y = _conv_same(y, w2_ref[...], pad_ref, H=H, W=W, ker=ker, pad=pad)
    o_ref[...] = _instance_norm_relu(y)


def _pack_weight(w, cin_p, cout_p):
    # PyTorch OIHW (Cout, Cin, k, k) -> (Cout_p, k*k*Cin_p); column order (ky, kx,
    # cin) matches the in-kernel patch layout; padded channels are zero.
    cout, cin, kh, kw = w.shape
    wt = jnp.transpose(w, (0, 2, 3, 1))                                # (Co,k,k,Ci)
    wt = jnp.pad(wt, ((0, cout_p - cout), (0, 0), (0, 0), (0, cin_p - cin)))
    return wt.reshape(cout_p, kh * kw * cin_p).astype(jnp.float32)


@jax.jit
def unet_double_conv_forward(x_nchw, w1, w2):
    """Forward pass of unet_double_conv (bias-free convs, ker = w1.shape[-1])."""
    B, Cin, H, W = x_nchw.shape
    Cout, ker = w1.shape[0], w1.shape[-1]
    r = ker // 2
    S = H * W

    Cin_p = _round_up(Cin, _SUB)
    Cout_p = _round_up(Cout, _SUB)
    Cmax = max(Cin_p, Cout_p)
    pad = _round_up(max(r * (W + 1), 1), _LANE)       # flat pad, lane-aligned

    xf = x_nchw.reshape(B, Cin, S).astype(jnp.float32)
    xf = jnp.pad(xf, ((0, 0), (0, Cin_p - Cin), (0, 0)))   # sublane-align channels

    w1m = _pack_weight(w1, Cin_p, Cout_p)     # (Cout_p, k*k*Cin_p)
    w2m = _pack_weight(w2, Cout_p, Cout_p)    # (Cout_p, k*k*Cout_p)

    kernel = functools.partial(_double_conv_kernel, H=H, W=W, ker=ker, pad=pad)
    out = pl.pallas_call(
        kernel,
        grid=(B,),
        in_specs=[
            pl.BlockSpec((None, Cin_p, S), lambda b: (b, 0, 0)),
            pl.BlockSpec((Cout_p, ker * ker * Cin_p), lambda b: (0, 0)),
            pl.BlockSpec((Cout_p, ker * ker * Cout_p), lambda b: (0, 0)),
        ],
        out_specs=pl.BlockSpec((None, Cout_p, S), lambda b: (b, 0, 0)),
        out_shape=jax.ShapeDtypeStruct((B, Cout_p, S), jnp.float32),
        scratch_shapes=[pltpu.VMEM((Cmax, S + 2 * pad), jnp.float32)],
        compiler_params=pltpu.CompilerParams(
            dimension_semantics=("parallel",)),
    )(xf, w1m, w2m)

    return out[:, :Cout, :].reshape(B, Cout, H, W)


# ----------------------------- pure-JAX reference ----------------------------

def reference_forward(x_nchw, w1, w2):
    ker = w1.shape[-1]
    p = ker // 2
    dn = ("NCHW", "OIHW", "NCHW")

    def inorm_relu(v):
        m = jnp.mean(v, axis=(2, 3), keepdims=True)
        var = jnp.mean(jnp.square(v - m), axis=(2, 3), keepdims=True)
        return jnp.maximum((v - m) * lax.rsqrt(var + EPS), 0.0)

    y = lax.conv_general_dilated(x_nchw, w1, (1, 1), ((p, p), (p, p)),
                                 dimension_numbers=dn, precision=_PREC)
    y = inorm_relu(y)
    y = lax.conv_general_dilated(y, w2, (1, 1), ((p, p), (p, p)),
                                 dimension_numbers=dn, precision=_PREC)
    return inorm_relu(y)


# ----------------------------------- main ------------------------------------

if __name__ == "__main__":
    B, in_ch, out_ch, H, W = 2, 4, 8, 16, 16
    key = jax.random.PRNGKey(0)
    kx, k1, k2 = jax.random.split(key, 3)
    x = jax.random.normal(kx, (B, in_ch, H, W), jnp.float32)
    # PyTorch-style OIHW conv weights (bias=False).
    w1 = jax.random.normal(k1, (out_ch, in_ch, 3, 3), jnp.float32) / math.sqrt(9 * in_ch)
    w2 = jax.random.normal(k2, (out_ch, out_ch, 3, 3), jnp.float32) / math.sqrt(9 * out_ch)

    out = jax.block_until_ready(unet_double_conv_forward(x, w1, w2))
    assert out.shape == (B, out_ch, H, W), out.shape

    ref = jax.block_until_ready(reference_forward(x, w1, w2))
    err = float(np.max(np.abs(np.asarray(out) - np.asarray(ref))))
    assert np.allclose(np.asarray(out), np.asarray(ref), rtol=1e-3, atol=1e-3), err

    print("KERNEL_OK")
</pallas_src>

<mosaic_0001>
module attributes {stable_mosaic.version = 11 : i64} {
  func.func @_double_conv_kernel(%arg0: i32, %arg1: memref<1x8x256xf32, #tpu.memory_space<vmem>>, %arg2: memref<8x72xf32, #tpu.memory_space<vmem>>, %arg3: memref<8x72xf32, #tpu.memory_space<vmem>>, %arg4: memref<1x8x256xf32, #tpu.memory_space<vmem>>, %arg5: memref<8x512xf32, #tpu.memory_space<vmem>>) attributes {dimension_semantics = [#tpu.dimension_semantics<parallel>], iteration_bounds = array<i64: 2>, scalar_prefetch = 0 : i64, scratch_operands = 1 : i64, tpu.core_type = #tpu.core_type<tc>, window_params = [{transform_indices = @transform_0, window_bounds = array<i64: 1, 8, 256>}, {pipeline_mode = #tpu.pipeline_mode<synchronous>, transform_indices = @transform_1, window_bounds = array<i64: 8, 72>}, {pipeline_mode = #tpu.pipeline_mode<synchronous>, transform_indices = @transform_2, window_bounds = array<i64: 8, 72>}, {transform_indices = @transform_3, window_bounds = array<i64: 1, 8, 256>}]} {
    %c0 = arith.constant 0 : index
    %c0_0 = arith.constant 0 : index
    %c0_1 = arith.constant 0 : index
    %0 = vector.load %arg1[%c0, %c0_0, %c0_1] : memref<1x8x256xf32, #tpu.memory_space<vmem>>, vector<1x8x256xf32>
    %1 = vector.shape_cast %0 : vector<1x8x256xf32> to vector<8x256xf32>
    %c0_2 = arith.constant 0 : index
    %c0_3 = arith.constant 0 : index
    %2 = vector.load %arg2[%c0_2, %c0_3] : memref<8x72xf32, #tpu.memory_space<vmem>>, vector<8x72xf32>
    %cst = arith.constant 0.000000e+00 : f32
    %3 = vector.broadcast %cst : f32 to vector<8x512xf32>
    %c0_4 = arith.constant 0 : index
    %c0_5 = arith.constant 0 : index
    %4 = vector.load %arg5[%c0_4, %c0_5] : memref<8x512xf32, #tpu.memory_space<vmem>>, vector<8x512xf32>
    tpu.vector_store %arg5[%c0_4, %c0_5], %3 {strides = array<i32>} : memref<8x512xf32, #tpu.memory_space<vmem>>, vector<8x512xf32>,
    %c0_6 = arith.constant 0 : index
    %c128 = arith.constant 128 : index
    %5 = vector.load %arg5[%c0_6, %c128] : memref<8x512xf32, #tpu.memory_space<vmem>>, vector<8x256xf32>
    tpu.vector_store %arg5[%c0_6, %c128], %1 {strides = array<i32>} : memref<8x512xf32, #tpu.memory_space<vmem>>, vector<8x256xf32>,
    %6 = tpu.iota {dimensions = array<i32: 1>} : vector<1x256xi32>
    %c16_i32 = arith.constant 16 : i32
    %c0_i32 = arith.constant 0 : i32
    %7 = arith.cmpi eq, %c16_i32, %c0_i32 : i32
    %c1_i32 = arith.constant 1 : i32
    %8 = arith.select %7, %c1_i32, %c16_i32 : i32
    %9 = vector.broadcast %8 : i32 to vector<1x256xi32>
    %10 = arith.remsi %6, %9 : vector<1x256xi32>
    %c0_i32_7 = arith.constant 0 : i32
    %11 = vector.broadcast %c0_i32_7 : i32 to vector<1x256xi32>
    %12 = arith.cmpi ne, %10, %11 : vector<1x256xi32>
    %c0_i32_8 = arith.constant 0 : i32
    %13 = vector.broadcast %c0_i32_8 : i32 to vector<1x256xi32>
    %14 = arith.cmpi slt, %10, %13 : vector<1x256xi32>
    %c0_i32_9 = arith.constant 0 : i32
    %15 = arith.cmpi slt, %8, %c0_i32_9 : i32
    %16 = vector.broadcast %15 : i1 to vector<1x256xi1>
    %17 = vector.broadcast %16 : vector<1x256xi1> to vector<1x256xi1>
    %18 = arith.xori %14, %17 : vector<1x256xi1>
    %19 = arith.andi %18, %12 : vector<1x256xi1>
    %20 = vector.broadcast %8 : i32 to vector<1x256xi32>
    %21 = arith.addi %10, %20 : vector<1x256xi32>
    %22 = arith.select %19, %21, %10 : vector<1x256xi1>, vector<1x256xi32>
    %c0_10 = arith.constant 0 : index
    %c111 = arith.constant 111 : index
    %23 = vector.load %arg5[%c0_10, %c111] : memref<8x512xf32, #tpu.memory_space<vmem>>, vector<8x256xf32>
    %c-1_i32 = arith.constant -1 : i32
    %24 = vector.broadcast %c-1_i32 : i32 to vector<1x256xi32>
    %25 = arith.addi %22, %24 : vector<1x256xi32>
    %c0_i32_11 = arith.constant 0 : i32
    %26 = vector.broadcast %c0_i32_11 : i32 to vector<1x256xi32>
    %27 = arith.cmpi sge, %25, %26 : vector<1x256xi32>
    %c-1_i32_12 = arith.constant -1 : i32
    %28 = vector.broadcast %c-1_i32_12 : i32 to vector<1x256xi32>
    %29 = arith.addi %22, %28 : vector<1x256xi32>
    %c16_i32_13 = arith.constant 16 : i32
    %30 = vector.broadcast %c16_i32_13 : i32 to vector<1x256xi32>
    %31 = arith.cmpi slt, %29, %30 : vector<1x256xi32>
    %32 = arith.andi %27, %31 : vector<1x256xi1>
    %cst_14 = arith.constant 0.000000e+00 : f32
    %33 = vector.shape_cast %32 : vector<1x256xi1> to vector<1x256xi1>
    %34 = vector.broadcast %33 : vector<1x256xi1> to vector<8x256xi1>
    %35 = vector.broadcast %cst_14 : f32 to vector<8x256xf32>
    %36 = arith.select %34, %23, %35 : vector<8x256xi1>, vector<8x256xf32>
    %c0_15 = arith.constant 0 : index
    %c112 = arith.constant 112 : index
    %37 = vector.load %arg5[%c0_15, %c112] : memref<8x512xf32, #tpu.memory_space<vmem>>, vector<8x256xf32>
    %c0_16 = arith.constant 0 : index
    %c113 = arith.constant 113 : index
    %38 = vector.load %arg5[%c0_16, %c113] : memref<8x512xf32, #tpu.memory_space<vmem>>, vector<8x256xf32>
    %c1_i32_17 = arith.constant 1 : i32
    %39 = vector.broadcast %c1_i32_17 : i32 to vector<1x256xi32>
    %40 = arith.addi %22, %39 : vector<1x256xi32>
    %c0_i32_18 = arith.constant 0 : i32
    %41 = vector.broadcast %c0_i32_18 : i32 to vector<1x256xi32>
    %42 = arith.cmpi sge, %40, %41 : vector<1x256xi32>
    %c1_i32_19 = arith.constant 1 : i32
    %43 = vector.broadcast %c1_i32_19 : i32 to vector<1x256xi32>
    %44 = arith.addi %22, %43 : vector<1x256xi32>
    %c16_i32_20 = arith.constant 16 : i32
    %45 = vector.broadcast %c16_i32_20 : i32 to vector<1x256xi32>
    %46 = arith.cmpi slt, %44, %45 : vector<1x256xi32>
    %47 = arith.andi %42, %46 : vector<1x256xi1>
    %cst_21 = arith.constant 0.000000e+00 : f32
    %48 = vector.shape_cast %47 : vector<1x256xi1> to vector<1x256xi1>
    %49 = vector.broadcast %48 : vector<1x256xi1> to vector<8x256xi1>
    %50 = vector.broadcast %cst_21 : f32 to vector<8x256xf32>
    %51 = arith.select %49, %38, %50 : vector<8x256xi1>, vector<8x256xf32>
    %c0_22 = arith.constant 0 : index
    %c127 = arith.constant 127 : index
    %52 = vector.load %arg5[%c0_22, %c127] : memref<8x512xf32, #tpu.memory_space<vmem>>, vector<8x256xf32>
    %c-1_i32_23 = arith.constant -1 : i32
    %53 = vector.broadcast %c-1_i32_23 : i32 to vector<1x256xi32>
    %54 = arith.addi %22, %53 : vector<1x256xi32>
    %c0_i32_24 = arith.constant 0 : i32
    %55 = vector.broadcast %c0_i32_24 : i32 to vector<1x256xi32>
    %56 = arith.cmpi sge, %54, %55 : vector<1x256xi32>
    %c-1_i32_25 = arith.constant -1 : i32
    %57 = vector.broadcast %c-1_i32_25 : i32 to vector<1x256xi32>
    %58 = arith.addi %22, %57 : vector<1x256xi32>
    %c16_i32_26 = arith.constant 16 : i32
    %59 = vector.broadcast %c16_i32_26 : i32 to vector<1x256xi32>
    %60 = arith.cmpi slt, %58, %59 : vector<1x256xi32>
    %61 = arith.andi %56, %60 : vector<1x256xi1>
    %cst_27 = arith.constant 0.000000e+00 : f32
    %62 = vector.shape_cast %61 : vector<1x256xi1> to vector<1x256xi1>
    %63 = vector.broadcast %62 : vector<1x256xi1> to vector<8x256xi1>
    %64 = vector.broadcast %cst_27 : f32 to vector<8x256xf32>
    %65 = arith.select %63, %52, %64 : vector<8x256xi1>, vector<8x256xf32>
    %c0_28 = arith.constant 0 : index
    %c128_29 = arith.constant 128 : index
    %66 = vector.load %arg5[%c0_28, %c128_29] : memref<8x512xf32, #tpu.memory_space<vmem>>, vector<8x256xf32>
    %c0_30 = arith.constant 0 : index
    %c129 = arith.constant 129 : index
    %67 = vector.load %arg5[%c0_30, %c129] : memref<8x512xf32, #tpu.memory_space<vmem>>, vector<8x256xf32>
    %c1_i32_31 = arith.constant 1 : i32
    %68 = vector.broadcast %c1_i32_31 : i32 to vector<1x256xi32>
    %69 = arith.addi %22, %68 : vector<1x256xi32>
    %c0_i32_32 = arith.constant 0 : i32
    %70 = vector.broadcast %c0_i32_32 : i32 to vector<1x256xi32>
    %71 = arith.cmpi sge, %69, %70 : vector<1x256xi32>
    %c1_i32_33 = arith.constant 1 : i32
    %72 = vector.broadcast %c1_i32_33 : i32 to vector<1x256xi32>
    %73 = arith.addi %22, %72 : vector<1x256xi32>
    %c16_i32_34 = arith.constant 16 : i32
    %74 = vector.broadcast %c16_i32_34 : i32 to vector<1x256xi32>
    %75 = arith.cmpi slt, %73, %74 : vector<1x256xi32>
    %76 = arith.andi %71, %75 : vector<1x256xi1>
    %cst_35 = arith.constant 0.000000e+00 : f32
    %77 = vector.shape_cast %76 : vector<1x256xi1> to vector<1x256xi1>
    %78 = vector.broadcast %77 : vector<1x256xi1> to vector<8x256xi1>
    %79 = vector.broadcast %cst_35 : f32 to vector<8x256xf32>
    %80 = arith.select %78, %67, %79 : vector<8x256xi1>, vector<8x256xf32>
    %c0_36 = arith.constant 0 : index
    %c143 = arith.constant 143 : index
    %81 = vector.load %arg5[%c0_36, %c143] : memref<8x512xf32, #tpu.memory_space<vmem>>, vector<8x256xf32>
    %c-1_i32_37 = arith.constant -1 : i32
    %82 = vector.broadcast %c-1_i32_37 : i32 to vector<1x256xi32>
    %83 = arith.addi %22, %82 : vector<1x256xi32>
    %c0_i32_38 = arith.constant 0 : i32
    %84 = vector.broadcast %c0_i32_38 : i32 to vector<1x256xi32>
    %85 = arith.cmpi sge, %83, %84 : vector<1x256xi32>
    %c-1_i32_39 = arith.constant -1 : i32
    %86 = vector.broadcast %c-1_i32_39 : i32 to vector<1x256xi32>
    %87 = arith.addi %22, %86 : vector<1x256xi32>
    %c16_i32_40 = arith.constant 16 : i32
    %88 = vector.broadcast %c16_i32_40 : i32 to vector<1x256xi32>
    %89 = arith.cmpi slt, %87, %88 : vector<1x256xi32>
    %90 = arith.andi %85, %89 : vector<1x256xi1>
    %cst_41 = arith.constant 0.000000e+00 : f32
    %91 = vector.shape_cast %90 : vector<1x256xi1> to vector<1x256xi1>
    %92 = vector.broadcast %91 : vector<1x256xi1> to vector<8x256xi1>
    %93 = vector.broadcast %cst_41 : f32 to vector<8x256xf32>
    %94 = arith.select %92, %81, %93 : vector<8x256xi1>, vector<8x256xf32>
    %c0_42 = arith.constant 0 : index
    %c144 = arith.constant 144 : index
    %95 = vector.load %arg5[%c0_42, %c144] : memref<8x512xf32, #tpu.memory_space<vmem>>, vector<8x256xf32>
    %c0_43 = arith.constant 0 : index
    %c145 = arith.constant 145 : index
    %96 = vector.load %arg5[%c0_43, %c145] : memref<8x512xf32, #tpu.memory_space<vmem>>, vector<8x256xf32>
    %c1_i32_44 = arith.constant 1 : i32
    %97 = vector.broadcast %c1_i32_44 : i32 to vector<1x256xi32>
    %98 = arith.addi %22, %97 : vector<1x256xi32>
    %c0_i32_45 = arith.constant 0 : i32
    %99 = vector.broadcast %c0_i32_45 : i32 to vector<1x256xi32>
    %100 = arith.cmpi sge, %98, %99 : vector<1x256xi32>
    %c1_i32_46 = arith.constant 1 : i32
    %101 = vector.broadcast %c1_i32_46 : i32 to vector<1x256xi32>
    %102 = arith.addi %22, %101 : vector<1x256xi32>
    %c16_i32_47 = arith.constant 16 : i32
    %103 = vector.broadcast %c16_i32_47 : i32 to vector<1x256xi32>
    %104 = arith.cmpi slt, %102, %103 : vector<1x256xi32>
    %105 = arith.andi %100, %104 : vector<1x256xi1>
    %cst_48 = arith.constant 0.000000e+00 : f32
    %106 = vector.shape_cast %105 : vector<1x256xi1> to vector<1x256xi1>
    %107 = vector.broadcast %106 : vector<1x256xi1> to vector<8x256xi1>
    %108 = vector.broadcast %cst_48 : f32 to vector<8x256xf32>
    %109 = arith.select %107, %96, %108 : vector<8x256xi1>, vector<8x256xf32>
    %110 = tpu.concatenate %36, %37, %51, %65, %66, %80, %94, %95, %109 in 0 : vector<8x256xf32>, vector<8x256xf32>, vector<8x256xf32>, vector<8x256xf32>, vector<8x256xf32>, vector<8x256xf32>, vector<8x256xf32>, vector<8x256xf32>, vector<8x256xf32> -> vector<72x256xf32>
    %cst_49 = arith.constant dense<0.000000e+00> : vector<8x256xf32>
    %111 = tpu.matmul %2, %110, %cst_49 {dimension_numbers = #tpu.dot_dimension_numbers<[1], [0], [0], [1], [0, 0, 1, 1], [], []>, precision = #tpu.contract_precision<fp32>} : vector<8x72xf32>, vector<72x256xf32>, vector<8x256xf32> -> vector<8x256xf32>
    %cst_50 = arith.constant dense<0.000000e+00> : vector<8xf32>
    %112 = vector.multi_reduction <add>, %111, %cst_50 [1] : vector<8x256xf32> to vector<8xf32>
    %113 = vector.shape_cast %112 : vector<8xf32> to vector<8x1xf32>
    %cst_51 = arith.constant 2.560000e+02 : f32
    %114 = vector.broadcast %cst_51 : f32 to vector<8x1xf32>
    %115 = arith.divf %113, %114 : vector<8x1xf32>
    %116 = vector.broadcast %115 : vector<8x1xf32> to vector<8x256xf32>
    %117 = arith.subf %111, %116 : vector<8x256xf32>
    %118 = arith.mulf %117, %117 : vector<8x256xf32>
    %cst_52 = arith.constant dense<0.000000e+00> : vector<8xf32>
    %119 = vector.multi_reduction <add>, %118, %cst_52 [1] : vector<8x256xf32> to vector<8xf32>
    %120 = vector.shape_cast %119 : vector<8xf32> to vector<8x1xf32>
    %cst_53 = arith.constant 2.560000e+02 : f32
    %121 = vector.broadcast %cst_53 : f32 to vector<8x1xf32>
    %122 = arith.divf %120, %121 : vector<8x1xf32>
    %123 = vector.broadcast %115 : vector<8x1xf32> to vector<8x256xf32>
    %124 = arith.subf %111, %123 : vector<8x256xf32>
    %cst_54 = arith.constant 9.99999974E-6 : f32
    %125 = vector.broadcast %cst_54 : f32 to vector<8x1xf32>
    %126 = arith.addf %122, %125 : vector<8x1xf32>
    %127 = math.rsqrt %126 : vector<8x1xf32>
    %128 = vector.broadcast %127 : vector<8x1xf32> to vector<8x256xf32>
    %129 = arith.mulf %124, %128 : vector<8x256xf32>
    %cst_55 = arith.constant 0.000000e+00 : f32
    %130 = vector.broadcast %cst_55 : f32 to vector<8x256xf32>
    %131 = arith.maximumf %129, %130 : vector<8x256xf32>
    %c0_56 = arith.constant 0 : index
    %c0_57 = arith.constant 0 : index
    %132 = vector.load %arg3[%c0_56, %c0_57] : memref<8x72xf32, #tpu.memory_space<vmem>>, vector<8x72xf32>
    %cst_58 = arith.constant 0.000000e+00 : f32
    %133 = vector.broadcast %cst_58 : f32 to vector<8x512xf32>
    %c0_59 = arith.constant 0 : index
    %c0_60 = arith.constant 0 : index
    %134 = vector.load %arg5[%c0_59, %c0_60] : memref<8x512xf32, #tpu.memory_space<vmem>>, vector<8x512xf32>
    tpu.vector_store %arg5[%c0_59, %c0_60], %133 {strides = array<i32>} : memref<8x512xf32, #tpu.memory_space<vmem>>, vector<8x512xf32>,
    %c0_61 = arith.constant 0 : index
    %c128_62 = arith.constant 128 : index
    %135 = vector.load %arg5[%c0_61, %c128_62] : memref<8x512xf32, #tpu.memory_space<vmem>>, vector<8x256xf32>
    tpu.vector_store %arg5[%c0_61, %c128_62], %131 {strides = array<i32>} : memref<8x512xf32, #tpu.memory_space<vmem>>, vector<8x256xf32>,
    %136 = tpu.iota {dimensions = array<i32: 1>} : vector<1x256xi32>
    %c16_i32_63 = arith.constant 16 : i32
    %c0_i32_64 = arith.constant 0 : i32
    %137 = arith.cmpi eq, %c16_i32_63, %c0_i32_64 : i32
    %c1_i32_65 = arith.constant 1 : i32
    %138 = arith.select %137, %c1_i32_65, %c16_i32_63 : i32
    %139 = vector.broadcast %138 : i32 to vector<1x256xi32>
    %140 = arith.remsi %136, %139 : vector<1x256xi32>
    %c0_i32_66 = arith.constant 0 : i32
    %141 = vector.broadcast %c0_i32_66 : i32 to vector<1x256xi32>
    %142 = arith.cmpi ne, %140, %141 : vector<1x256xi32>
    %c0_i32_67 = arith.constant 0 : i32
    %143 = vector.broadcast %c0_i32_67 : i32 to vector<1x256xi32>
    %144 = arith.cmpi slt, %140, %143 : vector<1x256xi32>
    %c0_i32_68 = arith.constant 0 : i32
    %145 = arith.cmpi slt, %138, %c0_i32_68 : i32
    %146 = vector.broadcast %145 : i1 to vector<1x256xi1>
    %147 = vector.broadcast %146 : vector<1x256xi1> to vector<1x256xi1>
    %148 = arith.xori %144, %147 : vector<1x256xi1>
    %149 = arith.andi %148, %142 : vector<1x256xi1>
    %150 = vector.broadcast %138 : i32 to vector<1x256xi32>
    %151 = arith.addi %140, %150 : vector<1x256xi32>
    %152 = arith.select %149, %151, %140 : vector<1x256xi1>, vector<1x256xi32>
    %c0_69 = arith.constant 0 : index
    %c111_70 = arith.constant 111 : index
    %153 = vector.load %arg5[%c0_69, %c111_70] : memref<8x512xf32, #tpu.memory_space<vmem>>, vector<8x256xf32>
    %c-1_i32_71 = arith.constant -1 : i32
    %154 = vector.broadcast %c-1_i32_71 : i32 to vector<1x256xi32>
    %155 = arith.addi %152, %154 : vector<1x256xi32>
    %c0_i32_72 = arith.constant 0 : i32
    %156 = vector.broadcast %c0_i32_72 : i32 to vector<1x256xi32>
    %157 = arith.cmpi sge, %155, %156 : vector<1x256xi32>
    %c-1_i32_73 = arith.constant -1 : i32
    %158 = vector.broadcast %c-1_i32_73 : i32 to vector<1x256xi32>
    %159 = arith.addi %152, %158 : vector<1x256xi32>
    %c16_i32_74 = arith.constant 16 : i32
    %160 = vector.broadcast %c16_i32_74 : i32 to vector<1x256xi32>
    %161 = arith.cmpi slt, %159, %160 : vector<1x256xi32>
    %162 = arith.andi %157, %161 : vector<1x256xi1>
    %cst_75 = arith.constant 0.000000e+00 : f32
    %163 = vector.shape_cast %162 : vector<1x256xi1> to vector<1x256xi1>
    %164 = vector.broadcast %163 : vector<1x256xi1> to vector<8x256xi1>
    %165 = vector.broadcast %cst_75 : f32 to vector<8x256xf32>
    %166 = arith.select %164, %153, %165 : vector<8x256xi1>, vector<8x256xf32>
    %c0_76 = arith.constant 0 : index
    %c112_77 = arith.constant 112 : index
    %167 = vector.load %arg5[%c0_76, %c112_77] : memref<8x512xf32, #tpu.memory_space<vmem>>, vector<8x256xf32>
    %c0_78 = arith.constant 0 : index
    %c113_79 = arith.constant 113 : index
    %168 = vector.load %arg5[%c0_78, %c113_79] : memref<8x512xf32, #tpu.memory_space<vmem>>, vector<8x256xf32>
    %c1_i32_80 = arith.constant 1 : i32
    %169 = vector.broadcast %c1_i32_80 : i32 to vector<1x256xi32>
    %170 = arith.addi %152, %169 : vector<1x256xi32>
    %c0_i32_81 = arith.constant 0 : i32
    %171 = vector.broadcast %c0_i32_81 : i32 to vector<1x256xi32>
    %172 = arith.cmpi sge, %170, %171 : vector<1x256xi32>
    %c1_i32_82 = arith.constant 1 : i32
    %173 = vector.broadcast %c1_i32_82 : i32 to vector<1x256xi32>
    %174 = arith.addi %152, %173 : vector<1x256xi32>
    %c16_i32_83 = arith.constant 16 : i32
    %175 = vector.broadcast %c16_i32_83 : i32 to vector<1x256xi32>
    %176 = arith.cmpi slt, %174, %175 : vector<1x256xi32>
    %177 = arith.andi %172, %176 : vector<1x256xi1>
    %cst_84 = arith.constant 0.000000e+00 : f32
    %178 = vector.shape_cast %177 : vector<1x256xi1> to vector<1x256xi1>
    %179 = vector.broadcast %178 : vector<1x256xi1> to vector<8x256xi1>
    %180 = vector.broadcast %cst_84 : f32 to vector<8x256xf32>
    %181 = arith.select %179, %168, %180 : vector<8x256xi1>, vector<8x256xf32>
    %c0_85 = arith.constant 0 : index
    %c127_86 = arith.constant 127 : index
    %182 = vector.load %arg5[%c0_85, %c127_86] : memref<8x512xf32, #tpu.memory_space<vmem>>, vector<8x256xf32>
    %c-1_i32_87 = arith.constant -1 : i32
    %183 = vector.broadcast %c-1_i32_87 : i32 to vector<1x256xi32>
    %184 = arith.addi %152, %183 : vector<1x256xi32>
    %c0_i32_88 = arith.constant 0 : i32
    %185 = vector.broadcast %c0_i32_88 : i32 to vector<1x256xi32>
    %186 = arith.cmpi sge, %184, %185 : vector<1x256xi32>
    %c-1_i32_89 = arith.constant -1 : i32
    %187 = vector.broadcast %c-1_i32_89 : i32 to vector<1x256xi32>
    %188 = arith.addi %152, %187 : vector<1x256xi32>
    %c16_i32_90 = arith.constant 16 : i32
    %189 = vector.broadcast %c16_i32_90 : i32 to vector<1x256xi32>
    %190 = arith.cmpi slt, %188, %189 : vector<1x256xi32>
    %191 = arith.andi %186, %190 : vector<1x256xi1>
    %cst_91 = arith.constant 0.000000e+00 : f32
    %192 = vector.shape_cast %191 : vector<1x256xi1> to vector<1x256xi1>
    %193 = vector.broadcast %192 : vector<1x256xi1> to vector<8x256xi1>
    %194 = vector.broadcast %cst_91 : f32 to vector<8x256xf32>
    %195 = arith.select %193, %182, %194 : vector<8x256xi1>, vector<8x256xf32>
    %c0_92 = arith.constant 0 : index
    %c128_93 = arith.constant 128 : index
    %196 = vector.load %arg5[%c0_92, %c128_93] : memref<8x512xf32, #tpu.memory_space<vmem>>, vector<8x256xf32>
    %c0_94 = arith.constant 0 : index
    %c129_95 = arith.constant 129 : index
    %197 = vector.load %arg5[%c0_94, %c129_95] : memref<8x512xf32, #tpu.memory_space<vmem>>, vector<8x256xf32>
    %c1_i32_96 = arith.constant 1 : i32
    %198 = vector.broadcast %c1_i32_96 : i32 to vector<1x256xi32>
    %199 = arith.addi %152, %198 : vector<1x256xi32>
    %c0_i32_97 = arith.constant 0 : i32
    %200 = vector.broadcast %c0_i32_97 : i32 to vector<1x256xi32>
    %201 = arith.cmpi sge, %199, %200 : vector<1x256xi32>
    %c1_i32_98 = arith.constant 1 : i32
    %202 = vector.broadcast %c1_i32_98 : i32 to vector<1x256xi32>
    %203 = arith.addi %152, %202 : vector<1x256xi32>
    %c16_i32_99 = arith.constant 16 : i32
    %204 = vector.broadcast %c16_i32_99 : i32 to vector<1x256xi32>
    %205 = arith.cmpi slt, %203, %204 : vector<1x256xi32>
    %206 = arith.andi %201, %205 : vector<1x256xi1>
    %cst_100 = arith.constant 0.000000e+00 : f32
    %207 = vector.shape_cast %206 : vector<1x256xi1> to vector<1x256xi1>
    %208 = vector.broadcast %207 : vector<1x256xi1> to vector<8x256xi1>
    %209 = vector.broadcast %cst_100 : f32 to vector<8x256xf32>
    %210 = arith.select %208, %197, %209 : vector<8x256xi1>, vector<8x256xf32>
    %c0_101 = arith.constant 0 : index
    %c143_102 = arith.constant 143 : index
    %211 = vector.load %arg5[%c0_101, %c143_102] : memref<8x512xf32, #tpu.memory_space<vmem>>, vector<8x256xf32>
    %c-1_i32_103 = arith.constant -1 : i32
    %212 = vector.broadcast %c-1_i32_103 : i32 to vector<1x256xi32>
    %213 = arith.addi %152, %212 : vector<1x256xi32>
    %c0_i32_104 = arith.constant 0 : i32
    %214 = vector.broadcast %c0_i32_104 : i32 to vector<1x256xi32>
    %215 = arith.cmpi sge, %213, %214 : vector<1x256xi32>
    %c-1_i32_105 = arith.constant -1 : i32
    %216 = vector.broadcast %c-1_i32_105 : i32 to vector<1x256xi32>
    %217 = arith.addi %152, %216 : vector<1x256xi32>
    %c16_i32_106 = arith.constant 16 : i32
    %218 = vector.broadcast %c16_i32_106 : i32 to vector<1x256xi32>
    %219 = arith.cmpi slt, %217, %218 : vector<1x256xi32>
    %220 = arith.andi %215, %219 : vector<1x256xi1>
    %cst_107 = arith.constant 0.000000e+00 : f32
    %221 = vector.shape_cast %220 : vector<1x256xi1> to vector<1x256xi1>
    %222 = vector.broadcast %221 : vector<1x256xi1> to vector<8x256xi1>
    %223 = vector.broadcast %cst_107 : f32 to vector<8x256xf32>
    %224 = arith.select %222, %211, %223 : vector<8x256xi1>, vector<8x256xf32>
    %c0_108 = arith.constant 0 : index
    %c144_109 = arith.constant 144 : index
    %225 = vector.load %arg5[%c0_108, %c144_109] : memref<8x512xf32, #tpu.memory_space<vmem>>, vector<8x256xf32>
    %c0_110 = arith.constant 0 : index
    %c145_111 = arith.constant 145 : index
    %226 = vector.load %arg5[%c0_110, %c145_111] : memref<8x512xf32, #tpu.memory_space<vmem>>, vector<8x256xf32>
    %c1_i32_112 = arith.constant 1 : i32
    %227 = vector.broadcast %c1_i32_112 : i32 to vector<1x256xi32>
    %228 = arith.addi %152, %227 : vector<1x256xi32>
    %c0_i32_113 = arith.constant 0 : i32
    %229 = vector.broadcast %c0_i32_113 : i32 to vector<1x256xi32>
    %230 = arith.cmpi sge, %228, %229 : vector<1x256xi32>
    %c1_i32_114 = arith.constant 1 : i32
    %231 = vector.broadcast %c1_i32_114 : i32 to vector<1x256xi32>
    %232 = arith.addi %152, %231 : vector<1x256xi32>
    %c16_i32_115 = arith.constant 16 : i32
    %233 = vector.broadcast %c16_i32_115 : i32 to vector<1x256xi32>
    %234 = arith.cmpi slt, %232, %233 : vector<1x256xi32>
    %235 = arith.andi %230, %234 : vector<1x256xi1>
    %cst_116 = arith.constant 0.000000e+00 : f32
    %236 = vector.shape_cast %235 : vector<1x256xi1> to vector<1x256xi1>
    %237 = vector.broadcast %236 : vector<1x256xi1> to vector<8x256xi1>
    %238 = vector.broadcast %cst_116 : f32 to vector<8x256xf32>
    %239 = arith.select %237, %226, %238 : vector<8x256xi1>, vector<8x256xf32>
    %240 = tpu.concatenate %166, %167, %181, %195, %196, %210, %224, %225, %239 in 0 : vector<8x256xf32>, vector<8x256xf32>, vector<8x256xf32>, vector<8x256xf32>, vector<8x256xf32>, vector<8x256xf32>, vector<8x256xf32>, vector<8x256xf32>, vector<8x256xf32> -> vector<72x256xf32>
    %cst_117 = arith.constant dense<0.000000e+00> : vector<8x256xf32>
    %241 = tpu.matmul %132, %240, %cst_117 {dimension_numbers = #tpu.dot_dimension_numbers<[1], [0], [0], [1], [0, 0, 1, 1], [], []>, precision = #tpu.contract_precision<fp32>} : vector<8x72xf32>, vector<72x256xf32>, vector<8x256xf32> -> vector<8x256xf32>
    %cst_118 = arith.constant dense<0.000000e+00> : vector<8xf32>
    %242 = vector.multi_reduction <add>, %241, %cst_118 [1] : vector<8x256xf32> to vector<8xf32>
    %243 = vector.shape_cast %242 : vector<8xf32> to vector<8x1xf32>
    %cst_119 = arith.constant 2.560000e+02 : f32
    %244 = vector.broadcast %cst_119 : f32 to vector<8x1xf32>
    %245 = arith.divf %243, %244 : vector<8x1xf32>
    %246 = vector.broadcast %245 : vector<8x1xf32> to vector<8x256xf32>
    %247 = arith.subf %241, %246 : vector<8x256xf32>
    %248 = arith.mulf %247, %247 : vector<8x256xf32>
    %cst_120 = arith.constant dense<0.000000e+00> : vector<8xf32>
    %249 = vector.multi_reduction <add>, %248, %cst_120 [1] : vector<8x256xf32> to vector<8xf32>
    %250 = vector.shape_cast %249 : vector<8xf32> to vector<8x1xf32>
    %cst_121 = arith.constant 2.560000e+02 : f32
    %251 = vector.broadcast %cst_121 : f32 to vector<8x1xf32>
    %252 = arith.divf %250, %251 : vector<8x1xf32>
    %253 = vector.broadcast %245 : vector<8x1xf32> to vector<8x256xf32>
    %254 = arith.subf %241, %253 : vector<8x256xf32>
    %cst_122 = arith.constant 9.99999974E-6 : f32
    %255 = vector.broadcast %cst_122 : f32 to vector<8x1xf32>
    %256 = arith.addf %252, %255 : vector<8x1xf32>
    %257 = math.rsqrt %256 : vector<8x1xf32>
    %258 = vector.broadcast %257 : vector<8x1xf32> to vector<8x256xf32>
    %259 = arith.mulf %254, %258 : vector<8x256xf32>
    %cst_123 = arith.constant 0.000000e+00 : f32
    %260 = vector.broadcast %cst_123 : f32 to vector<8x256xf32>
    %261 = arith.maximumf %259, %260 : vector<8x256xf32>
    %c0_124 = arith.constant 0 : index
    %c0_125 = arith.constant 0 : index
    %c0_126 = arith.constant 0 : index
    %262 = vector.load %arg4[%c0_124, %c0_125, %c0_126] : memref<1x8x256xf32, #tpu.memory_space<vmem>>, vector<1x8x256xf32>
    %263 = vector.shape_cast %262 : vector<1x8x256xf32> to vector<8x256xf32>
    %264 = vector.shape_cast %261 : vector<8x256xf32> to vector<1x8x256xf32>
    tpu.vector_store %arg4[%c0_124, %c0_125, %c0_126], %264 {strides = array<i32>} : memref<1x8x256xf32, #tpu.memory_space<vmem>>, vector<1x8x256xf32>,
    return
  }
  func.func @transform_0(%arg0: i32) -> (i32, i32, i32) {
    %c0_i32 = arith.constant 0 : i32
    %c0_i32_0 = arith.constant 0 : i32
    %c0_i32_1 = arith.constant 0 : i32
    return %arg0, %c0_i32, %c0_i32_0 : i32, i32, i32
  }
  func.func @transform_1(%arg0: i32) -> (i32, i32) {
    %c0_i32 = arith.constant 0 : i32
    %c0_i32_0 = arith.constant 0 : i32
    %c0_i32_1 = arith.constant 0 : i32
    return %c0_i32, %c0_i32_0 : i32, i32
  }
  func.func @transform_2(%arg0: i32) -> (i32, i32) {
    %c0_i32 = arith.constant 0 : i32
    %c0_i32_0 = arith.constant 0 : i32
    %c0_i32_1 = arith.constant 0 : i32
    return %c0_i32, %c0_i32_0 : i32, i32
  }
  func.func @transform_3(%arg0: i32) -> (i32, i32, i32) {
    %c0_i32 = arith.constant 0 : i32
    %c0_i32_0 = arith.constant 0 : i32
    %c0_i32_1 = arith.constant 0 : i32
    return %arg0, %c0_i32, %c0_i32_0 : i32, i32, i32
  }
}

</mosaic_0001>

<llo_original>
// kernel: unet_double_conv_forward.1
$region0: #{unet_double_conv_forward.1}
  #allocation0 [shape = 'u32[]', space=smem, size = 0x4, offset = 0x4, fixed_abs, tag = 'smem constant byte address 0x4 - core index']
  #allocation1 [shape = 'u32[144,128]{1,0:T(1,128)}', space=vmem, size = 0x12000, scoped, tag = 'internal scratch']
  #allocation2 [shape = 'f32[8,512]{1,0:T(8,128)}', space=vmem, size = 0x4000, scoped, tag = 'scratch operand']
  %s0 = inlined_call_operand.vmem [shape: f32[2,8,256], index: 0, kind: input, shape index: {}]
  %s1 = inlined_call_operand.vmem [shape: f32[8,72], index: 1, kind: input, shape index: {}]
  %s2 = inlined_call_operand.vmem [shape: f32[8,72], index: 2, kind: input, shape index: {}]
  %s3 = inlined_call_operand.vmem [shape: f32[2,8,256], index: 3, kind: output, shape index: {}]
  %s4 = sld [smem:[#allocation0]]
  $region45: #{unet_double_conv_forward.1} parent=0
    _
  %s6 = ssub.s32 1, %s4
  %s7 = scalar_select 0, %s6, %s4
  loop: start=0, step=1, limit=4
  $region2: #{unet_double_conv_forward.1} parent=0 // loop_pre_header
    _
  $region3: #{unet_double_conv_forward.1} parent=0 // loop_header
    %s9 = sphi 0, %s13
    %p10 = scmp.ge.s32.totalorder %s9, 4
    %s19 = sphi 0, %s21
    %s22 = sphi 0, %s19
    %s23 = sphi 0, %s22
    %s39 = sphi 0, %s23
    %s43 = sphi 0, %s43
    %s45 = sphi 0, %s43
    %s46 = sphi 0, %s45
    %s60 = sphi 0, %s46
    %s64 = sphi 0, %s64
    %s66 = sphi 0, %s64
    %s67 = sphi 0, %s66
    %s81 = sphi 0, %s67
    %s87 = sphi 0, %s89
    %s90 = sphi 0, %s87
    %s91 = sphi 0, %s90
    %s107 = sphi 0, %s91
  $region4: #{unet_double_conv_forward.1} parent=0 // loop_header_branch
    %12 = sbr.rel (%p10) target = $region8
  $region5: #{unet_double_conv_forward.1} parent=0 // loop_body
    %s14 = ssub.s32 %s9, 1
    %s15 = ssub.s32 %s9, 2
    %s16 = sadd.s32 %s9, 1
    %s17 = ssub.s32 %s9, %s16
    %p18 = scmp.eq.s32.totalorder %s17, 0
    %s20 = sadd.s32 %s19, 1
    %s21 = scalar_select %p18, %s19, %s20
    %p24 = pneg %p18
    %p25 = scmp.eq.s32.totalorder %s9, 1
    %p26 = por %p24, %p25
    %p27 = scmp.ne.s32.totalorder %s19, %s22
    %p28 = scmp.eq.s32.totalorder %s9, 0
    %p29 = por %p27, %p28
    %p30 = scmp.ne.s32.totalorder %s19, %s22
    %p31 = scmp.eq.s32.totalorder %s14, 1
    %p32 = por %p30, %p31
    %p33 = scmp.ne.s32.totalorder %s22, %s23
    %p34 = scmp.eq.s32.totalorder %s14, 0
    %p35 = por %p33, %p34
    %p36 = scmp.ne.s32.totalorder %s22, %s23
    %p37 = scmp.eq.s32.totalorder %s15, 1
    %p38 = por %p36, %p37
    %p40 = scmp.ne.s32.totalorder %s23, %s39
    %p41 = scmp.eq.s32.totalorder %s15, 0
    %p42 = por %p40, %p41
    %s44 = sadd.s32 %s43, 1
    %p47 = scmp.eq.s32.totalorder %s9, 1
    %p48 = scmp.ne.s32.totalorder %s43, %s45
    %p49 = scmp.eq.s32.totalorder %s9, 0
    %p50 = por %p48, %p49
    %p51 = scmp.ne.s32.totalorder %s43, %s45
    %p52 = scmp.eq.s32.totalorder %s14, 1
    %p53 = por %p51, %p52
    %p54 = scmp.ne.s32.totalorder %s45, %s46
    %p55 = scmp.eq.s32.totalorder %s14, 0
    %p56 = por %p54, %p55
    %p57 = scmp.ne.s32.totalorder %s45, %s46
    %p58 = scmp.eq.s32.totalorder %s15, 1
    %p59 = por %p57, %p58
    %p61 = scmp.ne.s32.totalorder %s46, %s60
    %p62 = scmp.eq.s32.totalorder %s15, 0
    %p63 = por %p61, %p62
    %s65 = sadd.s32 %s64, 1
    %p68 = scmp.eq.s32.totalorder %s9, 1
    %p69 = scmp.ne.s32.totalorder %s64, %s66
    %p70 = scmp.eq.s32.totalorder %s9, 0
    %p71 = por %p69, %p70
    %p72 = scmp.ne.s32.totalorder %s64, %s66
    %p73 = scmp.eq.s32.totalorder %s14, 1
    %p74 = por %p72, %p73
    %p75 = scmp.ne.s32.totalorder %s66, %s67
    %p76 = scmp.eq.s32.totalorder %s14, 0
    %p77 = por %p75, %p76
    %p78 = scmp.ne.s32.totalorder %s66, %s67
    %p79 = scmp.eq.s32.totalorder %s15, 1
    %p80 = por %p78, %p79
    %p82 = scmp.ne.s32.totalorder %s67, %s81
    %p83 = scmp.eq.s32.totalorder %s15, 0
    %p84 = por %p82, %p83
    %s85 = ssub.s32 %s9, %s16
    %p86 = scmp.eq.s32.totalorder %s85, 0
    %s88 = sadd.s32 %s87, 1
    %s89 = scalar_select %p86, %s87, %s88
    %p92 = pneg %p86
    %p93 = scmp.eq.s32.totalorder %s9, 1
    %p94 = por %p92, %p93
    %p95 = scmp.ne.s32.totalorder %s87, %s90
    %p96 = scmp.eq.s32.totalorder %s9, 0
    %p97 = por %p95, %p96
    %p98 = scmp.ne.s32.totalorder %s87, %s90
    %p99 = scmp.eq.s32.totalorder %s14, 1
    %p100 = por %p98, %p99
    %p101 = scmp.ne.s32.totalorder %s90, %s91
    %p102 = scmp.eq.s32.totalorder %s14, 0
    %p103 = por %p101, %p102
    %p104 = scmp.ne.s32.totalorder %s90, %s91
    %p105 = scmp.eq.s32.totalorder %s15, 1
    %p106 = por %p104, %p105
    %p108 = scmp.ne.s32.totalorder %s91, %s107
    %p109 = scmp.eq.s32.totalorder %s15, 0
    %p110 = por %p108, %p109
    %p111 = scmp.le.s32.totalorder 1, %s9
    %p112 = scmp.lt.s32.totalorder %s9, 3
    %p113 = pnand %p111, %p112
    %p114 = pneg %p113
    // Predicated region
    $region9: #{unet_double_conv_forward.1} parent=5 // pred_check
      _
    $region10: #{unet_double_conv_forward.1} parent=5 // pred_check_branch
      %116 = sbr.rel (%p113) target = $region12
    $region11: #{unet_double_conv_forward.1} parent=5 // pred_region
      %s117 = ssub.s32 %s9, 1
      // Predicated region
      $region13: #{unet_double_conv_forward.1} parent=11 // pred_check
        %p118 = pneg %p56
      $region14: #{unet_double_conv_forward.1} parent=11 // pred_check_branch
        %120 = sbr.rel (%p118) target = $region16
      $region15: #{unet_double_conv_forward.1} parent=11 // pred_region
        _
      $region16: #{unet_double_conv_forward.1} parent=11 // pred_fallthru
        _
      // Predicated region
      $region17: #{unet_double_conv_forward.1} parent=11 // pred_check
        %p121 = pneg %p77
      $region18: #{unet_double_conv_forward.1} parent=11 // pred_check_branch
        %123 = sbr.rel (%p121) target = $region20
      $region19: #{unet_double_conv_forward.1} parent=11 // pred_region
        _
      $region20: #{unet_double_conv_forward.1} parent=11 // pred_fallthru
        _
    $region12: #{unet_double_conv_forward.1} parent=5 // pred_fallthru
      _
    %p124 = scmp.lt.s32.totalorder %s9, 2
    // Predicated region
    $region21: #{unet_double_conv_forward.1} parent=5 // pred_check
      %p125 = pneg %p124
    $region22: #{unet_double_conv_forward.1} parent=5 // pred_check_branch
      %127 = sbr.rel (%p125) target = $region24
    $region23: #{unet_double_conv_forward.1} parent=5 // pred_region
      // Predicated region
      $region25: #{unet_double_conv_forward.1} parent=23 // pred_check
        %p128 = pneg %p29
      $region26: #{unet_double_conv_forward.1} parent=23 // pred_check_branch
        %130 = sbr.rel (%p128) target = $region28
      $region27: #{unet_double_conv_forward.1} parent=23 // pred_region
        %p131 = scmp.lt.s32.totalorder %s9, 1
        %s132 = scalar_select %p131, %s9, 1
        %s133 = smul.addr %s132, 2
        %s134 = smul.addr %s133, 8
        %s135 = scalar_lea.vmem %s0, %s134
      $region28: #{unet_double_conv_forward.1} parent=23 // pred_fallthru
        _
    $region24: #{unet_double_conv_forward.1} parent=5 // pred_fallthru
      _
    %p136 = scmp.le.s32.totalorder 1, %s9
    %p137 = scmp.lt.s32.totalorder %s9, 3
    %p138 = pnand %p136, %p137
    %p139 = pneg %p138
    // Predicated region
    $region29: #{unet_double_conv_forward.1} parent=5 // pred_check
      _
    $region30: #{unet_double_conv_forward.1} parent=5 // pred_check_branch
      %141 = sbr.rel (%p138) target = $region32
    $region31: #{unet_double_conv_forward.1} parent=5 // pred_region
      %s142 = ssub.s32 %s9, 1
      %p143 = scmp.lt.s32.totalorder %s14, 1
      %s144 = scalar_select %p143, %s14, 1
      %s145 = smul.addr %s144, 2
      %s146 = smul.addr %s145, 8
      %s147 = scalar_lea.vmem %s0, %s146
      %p148 = pneg %p35
      %p149 = pneg %p32
      %p150 = pneg %p56
      %p151 = pneg %p53
      %p152 = pneg %p77
      %p153 = pneg %p74
      %p154 = pneg %p103
      %p155 = pneg %p100
      %p156 = scmp.lt.s32.totalorder %s14, 1
      %s157 = scalar_select %p156, %s14, 1
      %s158 = smul.addr %s157, 2
      %s159 = smul.addr %s158, 8
      %s160 = scalar_lea.vmem %s3, %s159
      %p161 = scmp.lt.s32.totalorder %s14, 1
      %s162 = scalar_select %p161, %s14, 1
      %s163 = smul.addr %s162, 2
      %s164 = smul.addr %s163, 8
      %s165 = scalar_lea.vmem %s0, %s164
      %p166 = scmp.lt.s32.totalorder %s14, 1
      %s167 = scalar_select %p166, %s14, 1
      %s168 = smul.addr %s167, 2
      %s169 = smul.addr %s168, 8
      %s170 = scalar_lea.vmem %s3, %s169
      %v171 = vld [vmem:[%s165] sm:$0xff]
      %v172 = vld [vmem:[%s165 + $0x8] sm:$0xff]
      %v173 = vld [vmem:[%s1] sm:$0xff]
      %174 = vst [vmem:[#allocation2] sm:$0xff] 0.0
      %175 = vst [vmem:[#allocation2 + $0x8] sm:$0xff] 0.0
      %176 = vst [vmem:[#allocation2 + $0x10] sm:$0xff] 0.0
      %177 = vst [vmem:[#allocation2 + $0x18] sm:$0xff] 0.0
      %178 = vst [vmem:[#allocation2 + $0x8] sm:$0xff] %v171
      %179 = vst [vmem:[#allocation2 + $0x10] sm:$0xff] %v172
      %v180 = vlaneseq
      %v181 = vand.u32 %v180, 127
      %v182 = vadd.s32 %v181, 128
      %vm183 = vcmp.lt.s32.totalorder %v181, 0
      %v184 = vsub.s32 0, %v181
      %v185 = vsel %vm183, %v184, %v181
      %v186 = vshrl.u32 %v185, 4
      %v187 = vand.u32 %v185, 15
      %v188 = vsub.s32 0, %v187
      %v189 = vsel %vm183, %v188, %v187
      %vm190 = vcmp.lt.s32.totalorder %v182, 0
      %v191 = vsub.s32 0, %v182
      %v192 = vsel %vm190, %v191, %v182
      %v193 = vshrl.u32 %v192, 4
      %v194 = vand.u32 %v192, 15
      %v195 = vsub.s32 0, %v194
      %v196 = vsel %vm190, %v195, %v194
      %vm197 = vcmp.ne.s32.totalorder %v189, 0
      %vm198 = vcmp.ne.s32.totalorder %v196, 0
      %vm199 = vcmp.lt.s32.totalorder %v189, 0
      %vm200 = vcmp.lt.s32.totalorder %v196, 0
      %vm201 = vmand %vm199, %vm197
      %vm202 = vmand %vm200, %vm198
      %v203 = vadd.s32 %v189, 16
      %v204 = vadd.s32 %v196, 16
      %v205 = vsel %vm201, %v203, %v189
      %v206 = vsel %vm202, %v204, %v196
      %v207 = vld [vmem:[#allocation2] sm:$0xff]
      %v208 = vld [vmem:[#allocation2 + $0x8] sm:$0xff]
      %v209 = vld [vmem:[#allocation2 + $0x10] sm:$0xff]
      %v210 = vadd.s32 %v205, 4294967295
      %v211 = vadd.s32 %v206, 4294967295
      %vm212 = vcmp.ge.s32.totalorder %v210, 0
      %vm213 = vcmp.ge.s32.totalorder %v211, 0
      %vm214 = vcmp.lt.s32.totalorder %v210, 16
      %vm215 = vcmp.lt.s32.totalorder %v211, 16
      %vm216 = vmand %vm212, %vm214
      %vm217 = vmand %vm213, %vm215
      %v218 = vsel %vm216, 1, 0
      %v219 = vsel %vm217, 1, 0
      %vm220 = vcmp.eq.s32.totalorder %v218, 1
      %vm221 = vcmp.eq.s32.totalorder %v219, 1
      %225 = vrot.lane.b32.xlu0 %v207, 17
      %v226 = vpop.permute.xlu0 %225
      %227 = vrot.lane.b32.xlu0 %v208, 17
      %v228 = vpop.permute.xlu0 %227
      %229 = vrot.lane.b32.xlu0 %v209, 17
      %v230 = vpop.permute.xlu0 %229
      %vm231 = vcmask 138240
      %v232 = vsel %vm231, %v226, %v228
      %v233 = vsel %vm231, %v228, %v230
      %v236 = vsel %vm220, %v232, 0.0
      %v237 = vsel %vm221, %v233, 0.0
      %v238 = vadd.s32 %v205, 1
      %v239 = vadd.s32 %v206, 1
      %vm240 = vcmp.ge.s32.totalorder %v238, 0
      %vm241 = vcmp.ge.s32.totalorder %v239, 0
      %vm242 = vcmp.lt.s32.totalorder %v238, 16
      %vm243 = vcmp.lt.s32.totalorder %v239, 16
      %vm244 = vmand %vm240, %vm242
      %vm245 = vmand %vm241, %vm243
      %v246 = vsel %vm244, 1, 0
      %v247 = vsel %vm245, 1, 0
      %vm248 = vcmp.eq.s32.totalorder %v246, 1
      %vm249 = vcmp.eq.s32.totalorder %v247, 1
      %250 = vrot.lane.b32.xlu0 %v207, 15
      %v251 = vpop.permute.xlu0 %250
      %252 = vrot.lane.b32.xlu0 %v208, 15
      %v253 = vpop.permute.xlu0 %252
      %254 = vrot.lane.b32.xlu0 %v209, 15
      %v255 = vpop.permute.xlu0 %254
      %vm256 = vcmask 121856
      %v257 = vsel %vm256, %v251, %v253
      %v258 = vsel %vm256, %v253, %v255
      %v261 = vsel %vm248, %v257, 0.0
      %v262 = vsel %vm249, %v258, 0.0
      %263 = vrot.lane.b32.xlu0 %v207, 1
      %v264 = vpop.permute.xlu0 %263
      %265 = vrot.lane.b32.xlu0 %v208, 1
      %v266 = vpop.permute.xlu0 %265
      %267 = vrot.lane.b32.xlu0 %v209, 1
      %v268 = vpop.permute.xlu0 %267
      %vm269 = vcmask 7168
      %v270 = vsel %vm269, %v264, %v266
      %v271 = vsel %vm269, %v266, %v268
      %v274 = vsel %vm220, %v270, 0.0
      %v275 = vsel %vm221, %v271, 0.0
      %v276 = vld [vmem:[#allocation2 + $0x8] sm:$0xff]
      %v277 = vld [vmem:[#allocation2 + $0x10] sm:$0xff]
      %v278 = vld [vmem:[#allocation2 + $0x18] sm:$0xff]
      %282 = vrot.lane.b32.xlu0 %v276, 127
      %v283 = vpop.permute.xlu0 %282
      %284 = vrot.lane.b32.xlu0 %v277, 127
      %v285 = vpop.permute.xlu0 %284
      %286 = vrot.lane.b32.xlu0 %v278, 127
      %v287 = vpop.permute.xlu0 %286
      %vm288 = vcmask 1039360
      %v289 = vsel %vm288, %v283, %v285
      %v290 = vsel %vm288, %v285, %v287
      %v293 = vsel %vm248, %v289, 0.0
      %v294 = vsel %vm249, %v290, 0.0
      %295 = vrot.lane.b32.xlu0 %v276, 113
      %v296 = vpop.permute.xlu0 %295
      %297 = vrot.lane.b32.xlu0 %v277, 113
      %v298 = vpop.permute.xlu0 %297
      %299 = vrot.lane.b32.xlu0 %v278, 113
      %v300 = vpop.permute.xlu0 %299
      %vm301 = vcmask 924672
      %v302 = vsel %vm301, %v296, %v298
      %v303 = vsel %vm301, %v298, %v300
      %v306 = vsel %vm220, %v302, 0.0
      %v307 = vsel %vm221, %v303, 0.0
      %308 = vrot.lane.b32.xlu0 %v276, 111
      %v309 = vpop.permute.xlu0 %308
      %310 = vrot.lane.b32.xlu0 %v277, 111
      %v311 = vpop.permute.xlu0 %310
      %312 = vrot.lane.b32.xlu0 %v278, 111
      %v313 = vpop.permute.xlu0 %312
      %vm314 = vcmask 908288
      %v315 = vsel %vm314, %v309, %v311
      %v316 = vsel %vm314, %v311, %v313
      %v319 = vsel %vm248, %v315, 0.0
      %v320 = vsel %vm249, %v316, 0.0
      %321 = vrot.lane.b32.xlu0 %v207, 16
      %v322 = vpop.permute.xlu0 %321
      %323 = vrot.lane.b32.xlu0 %v208, 16
      %v324 = vpop.permute.xlu0 %323
      %325 = vrot.lane.b32.xlu0 %v209, 16
      %v326 = vpop.permute.xlu0 %325
      %vm327 = vcmask 130048
      %v328 = vsel %vm327, %v322, %v324
      %v329 = vsel %vm327, %v324, %v326
      %332 = vrot.lane.b32.xlu0 %v276, 112
      %v333 = vpop.permute.xlu0 %332
      %334 = vrot.lane.b32.xlu0 %v277, 112
      %v335 = vpop.permute.xlu0 %334
      %336 = vrot.lane.b32.xlu0 %v278, 112
      %v337 = vpop.permute.xlu0 %336
      %vm338 = vcmask 916480
      %v339 = vsel %vm338, %v333, %v335
      %v340 = vsel %vm338, %v335, %v337
      %vm343 = vcmask 588800
      %v345 = vsel %vm343, %v173, 0
      %v347 = vand.u32 %v237, 4294901760
      %348 = vmatprep.subr.mxu0 %v347
      %v349 = vand.u32 %v236, 4294901760
      %350 = vmatpush1.msra.mxu0 %v349
      %v351 = vand.u32 %v329, 4294901760
      %352 = vmatprep.subr.mxu0 %v351
      %v353 = vand.u32 %v328, 4294901760
      %354 = vmatpush1.msra.mxu0 %v353
      %v355 = vand.u32 %v262, 4294901760
      %356 = vmatprep.subr.mxu0 %v355
      %v357 = vand.u32 %v261, 4294901760
      %358 = vmatpush1.msra.mxu0 %v357
      %v359 = vand.u32 %v275, 4294901760
      %360 = vmatprep.subr.mxu0 %v359
      %v361 = vand.u32 %v274, 4294901760
      %362 = vmatpush1.msra.mxu0 %v361
      %v363 = vand.u32 %v209, 4294901760
      %364 = vmatprep.subr.mxu0 %v363
      %v365 = vand.u32 %v208, 4294901760
      %366 = vmatpush1.msra.mxu0 %v365
      %v367 = vand.u32 %v294, 4294901760
      %368 = vmatprep.subr.mxu0 %v367
      %v369 = vand.u32 %v293, 4294901760
      %370 = vmatpush1.msra.mxu0 %v369
      %v371 = vand.u32 %v307, 4294901760
      %372 = vmatprep.subr.mxu0 %v371
      %v373 = vand.u32 %v306, 4294901760
      %374 = vmatpush1.msra.mxu0 %v373
      %v375 = vand.u32 %v340, 4294901760
      %376 = vmatprep.subr.mxu0 %v375
      %v377 = vand.u32 %v339, 4294901760
      %378 = vmatpush1.msra.mxu0 %v377
      %v379 = vand.u32 %v320, 4294901760
      %380 = vmatprep.subr.mxu0 %v379
      %v381 = vand.u32 %v319, 4294901760
      %382 = vmatpush1.msra.mxu0 %v381
      %383 = vmatprep.subr.mxu0 0.0
      %384 = vmatpush1.msra.mxu0 0.0
      %385 = vmatprep.subr.mxu0 0.0
      %386 = vmatpush1.msra.mxu0 0.0
      %387 = vmatprep.subr.mxu0 0.0
      %388 = vmatpush1.msra.mxu0 0.0
      %389 = vmatprep.subr.mxu0 0.0
      %390 = vmatpush1.msra.mxu0 0.0
      %391 = vmatprep.subr.mxu0 0.0
      %392 = vmatpush1.msra.mxu0 0.0
      %393 = vmatprep.subr.mxu0 0.0
      %394 = vmatpush1.msra.mxu0 0.0
      %395 = vmatprep.subr.mxu0 0.0
      %396 = vmatpush1.msra.mxu0 0.0
      %397 = vmatprep.subr.mxu0 0.0
      %398 = vmatpush1.msra.mxu0 0.0
      %399 = vmatprep.subr.mxu0 0.0
      %400 = vmatpush1.msra.mxu0 0.0
      %401 = vmatprep.subr.mxu0 0.0
      %402 = vmatpush1.msra.mxu0 0.0
      %403 = vmatprep.subr.mxu0 0.0
      %404 = vmatpush1.msra.mxu0 0.0
      %405 = vmatprep.subr.mxu0 0.0
      %406 = vmatpush1.msra.mxu0 0.0
      %407 = vmatprep.subr.mxu0 0.0
      %408 = vmatpush1.msra.mxu0 0.0
      %409 = vmatprep.subr.mxu0 0.0
      %410 = vmatpush1.msra.mxu0 0.0
      %411 = vmatprep.subr.mxu0 0.0
      %412 = vmatpush1.msra.mxu0 0.0
      %413 = vmatprep.subr.mxu0 0.0
      %414 = vmatpush1.msra.mxu0 0.0
      %415 = vmatprep.subr.mxu0 0.0
      %416 = vmatpush1.msra.mxu0 0.0
      %417 = vmatprep.subr.mxu0 0.0
      %418 = vmatpush1.msra.mxu0 0.0
      %419 = vmatprep.subr.mxu0 0.0
      %420 = vmatpush1.msra.mxu0 0.0
      %421 = vmatprep.subr.mxu0 0.0
      %422 = vmatpush1.msra.mxu0 0.0
      %423 = vmatprep.subr.mxu0 0.0
      %424 = vmatpush1.msra.mxu0 0.0
      %425 = vmatprep.subr.mxu0 0.0
      %426 = vmatpush1.msra.mxu0 0.0
      %427 = vmatprep.subr.mxu0 0.0
      %428 = vmatpush1.msra.mxu0 0.0
      %429 = vmatprep.mubr.f32.mxu0 0.0
      %v430 = vand.u32 %v345, 4294901760
      %v431 = vsub.f32 %v345, %v430
      %v432 = vand.u32 %v431, 4294901760
      %v433 = vsub.f32 %v431, %v432
      %v434 = vand.u32 %v433, 4294901760
      %435 = vmatmul.mubr.f32.gmra.mrb[0].mxu0 %v434
      %v436 = vpop.f32.mrb[0].mxu0
      %v437 = vadd.f32 0.0, %v436
      %v438 = vpop.f32.mrb[0].mxu0
      %v439 = vadd.f32 0.0, %v438
      %440 = vdwg.mxu0
      %v441 = vand.u32 %v237, 4294901760
      %v442 = vsub.f32 %v237, %v441
      %v443 = vand.u32 %v442, 4294901760
      %v444 = vsub.f32 %v442, %v443
      %v445 = vand.u32 %v444, 4294901760
      %446 = vmatprep.subr.mxu0 %v445
      %v447 = vand.u32 %v236, 4294901760
      %v448 = vsub.f32 %v236, %v447
      %v449 = vand.u32 %v448, 4294901760
      %v450 = vsub.f32 %v448, %v449
      %v451 = vand.u32 %v450, 4294901760
      %452 = vmatpush1.msra.mxu0 %v451
      %v453 = vand.u32 %v329, 4294901760
      %v454 = vsub.f32 %v329, %v453
      %v455 = vand.u32 %v454, 4294901760
      %v456 = vsub.f32 %v454, %v455
      %v457 = vand.u32 %v456, 4294901760
      %458 = vmatprep.subr.mxu0 %v457
      %v459 = vand.u32 %v328, 4294901760
      %v460 = vsub.f32 %v328, %v459
      %v461 = vand.u32 %v460, 4294901760
      %v462 = vsub.f32 %v460, %v461
      %v463 = vand.u32 %v462, 4294901760
      %464 = vmatpush1.msra.mxu0 %v463
      %v465 = vand.u32 %v262, 4294901760
      %v466 = vsub.f32 %v262, %v465
      %v467 = vand.u32 %v466, 4294901760
      %v468 = vsub.f32 %v466, %v467
      %v469 = vand.u32 %v468, 4294901760
      %470 = vmatprep.subr.mxu0 %v469
      %v471 = vand.u32 %v261, 4294901760
      %v472 = vsub.f32 %v261, %v471
      %v473 = vand.u32 %v472, 4294901760
      %v474 = vsub.f32 %v472, %v473
      %v475 = vand.u32 %v474, 4294901760
      %476 = vmatpush1.msra.mxu0 %v475
      %v477 = vand.u32 %v275, 4294901760
      %v478 = vsub.f32 %v275, %v477
      %v479 = vand.u32 %v478, 4294901760
      %v480 = vsub.f32 %v478, %v479
      %v481 = vand.u32 %v480, 4294901760
      %482 = vmatprep.subr.mxu0 %v481
      %v483 = vand.u32 %v274, 4294901760
      %v484 = vsub.f32 %v274, %v483
      %v485 = vand.u32 %v484, 4294901760
      %v486 = vsub.f32 %v484, %v485
      %v487 = vand.u32 %v486, 4294901760
      %488 = vmatpush1.msra.mxu0 %v487
      %v489 = vand.u32 %v209, 4294901760
      %v490 = vsub.f32 %v209, %v489
      %v491 = vand.u32 %v490, 4294901760
      %v492 = vsub.f32 %v490, %v491
      %v493 = vand.u32 %v492, 4294901760
      %494 = vmatprep.subr.mxu0 %v493
      %v495 = vand.u32 %v208, 4294901760
      %v496 = vsub.f32 %v208, %v495
      %v497 = vand.u32 %v496, 4294901760
      %v498 = vsub.f32 %v496, %v497
      %v499 = vand.u32 %v498, 4294901760
      %500 = vmatpush1.msra.mxu0 %v499
      %v501 = vand.u32 %v294, 4294901760
      %v502 = vsub.f32 %v294, %v501
      %v503 = vand.u32 %v502, 4294901760
      %v504 = vsub.f32 %v502, %v503
      %v505 = vand.u32 %v504, 4294901760
      %506 = vmatprep.subr.mxu0 %v505
      %v507 = vand.u32 %v293, 4294901760
      %v508 = vsub.f32 %v293, %v507
      %v509 = vand.u32 %v508, 4294901760
      %v510 = vsub.f32 %v508, %v509
      %v511 = vand.u32 %v510, 4294901760
      %512 = vmatpush1.msra.mxu0 %v511
      %v513 = vand.u32 %v307, 4294901760
      %v514 = vsub.f32 %v307, %v513
      %v515 = vand.u32 %v514, 4294901760
      %v516 = vsub.f32 %v514, %v515
      %v517 = vand.u32 %v516, 4294901760
      %518 = vmatprep.subr.mxu0 %v517
      %v519 = vand.u32 %v306, 4294901760
      %v520 = vsub.f32 %v306, %v519
      %v521 = vand.u32 %v520, 4294901760
      %v522 = vsub.f32 %v520, %v521
      %v523 = vand.u32 %v522, 4294901760
      %524 = vmatpush1.msra.mxu0 %v523
      %v525 = vand.u32 %v340, 4294901760
      %v526 = vsub.f32 %v340, %v525
      %v527 = vand.u32 %v526, 4294901760
      %v528 = vsub.f32 %v526, %v527
      %v529 = vand.u32 %v528, 4294901760
      %530 = vmatprep.subr.mxu0 %v529
      %v531 = vand.u32 %v339, 4294901760
      %v532 = vsub.f32 %v339, %v531
      %v533 = vand.u32 %v532, 4294901760
      %v534 = vsub.f32 %v532, %v533
      %v535 = vand.u32 %v534, 4294901760
      %536 = vmatpush1.msra.mxu0 %v535
      %v537 = vand.u32 %v320, 4294901760
      %v538 = vsub.f32 %v320, %v537
      %v539 = vand.u32 %v538, 4294901760
      %v540 = vsub.f32 %v538, %v539
      %v541 = vand.u32 %v540, 4294901760
      %542 = vmatprep.subr.mxu0 %v541
      %v543 = vand.u32 %v319, 4294901760
      %v544 = vsub.f32 %v319, %v543
      %v545 = vand.u32 %v544, 4294901760
      %v546 = vsub.f32 %v544, %v545
      %v547 = vand.u32 %v546, 4294901760
      %548 = vmatpush1.msra.mxu0 %v547
      %549 = vmatprep.subr.mxu0 0.0
      %550 = vmatpush1.msra.mxu0 0.0
      %551 = vmatprep.subr.mxu0 0.0
      %552 = vmatpush1.msra.mxu0 0.0
      %553 = vmatprep.subr.mxu0 0.0
      %554 = vmatpush1.msra.mxu0 0.0
      %555 = vmatprep.subr.mxu0 0.0
      %556 = vmatpush1.msra.mxu0 0.0
      %557 = vmatprep.subr.mxu0 0.0
      %558 = vmatpush1.msra.mxu0 0.0
      %559 = vmatprep.subr.mxu0 0.0
      %560 = vmatpush1.msra.mxu0 0.0
      %561 = vmatprep.subr.mxu0 0.0
      %562 = vmatpush1.msra.mxu0 0.0
      %563 = vmatprep.subr.mxu0 0.0
      %564 = vmatpush1.msra.mxu0 0.0
      %565 = vmatprep.subr.mxu0 0.0
      %566 = vmatpush1.msra.mxu0 0.0
      %567 = vmatprep.subr.mxu0 0.0
      %568 = vmatpush1.msra.mxu0 0.0
      %569 = vmatprep.subr.mxu0 0.0
      %570 = vmatpush1.msra.mxu0 0.0
      %571 = vmatprep.subr.mxu0 0.0
      %572 = vmatpush1.msra.mxu0 0.0
      %573 = vmatprep.subr.mxu0 0.0
      %574 = vmatpush1.msra.mxu0 0.0
      %575 = vmatprep.subr.mxu0 0.0
      %576 = vmatpush1.msra.mxu0 0.0
      %577 = vmatprep.subr.mxu0 0.0
      %578 = vmatpush1.msra.mxu0 0.0
      %579 = vmatprep.subr.mxu0 0.0
      %580 = vmatpush1.msra.mxu0 0.0
      %581 = vmatprep.subr.mxu0 0.0
      %582 = vmatpush1.msra.mxu0 0.0
      %583 = vmatprep.subr.mxu0 0.0
      %584 = vmatpush1.msra.mxu0 0.0
      %585 = vmatprep.subr.mxu0 0.0
      %586 = vmatpush1.msra.mxu0 0.0
      %587 = vmatprep.subr.mxu0 0.0
      %588 = vmatpush1.msra.mxu0 0.0
      %589 = vmatprep.subr.mxu0 0.0
      %590 = vmatpush1.msra.mxu0 0.0
      %591 = vmatprep.subr.mxu0 0.0
      %592 = vmatpush1.msra.mxu0 0.0
      %593 = vmatprep.subr.mxu0 0.0
      %594 = vmatpush1.msra.mxu0 0.0
      %595 = vmatprep.mubr.f32.mxu0 0.0
      %v596 = vand.u32 %v345, 4294901760
      %597 = vmatmul.mubr.f32.gmra.mrb[0].mxu0 %v596
      %v598 = vpop.f32.mrb[0].mxu0
      %v599 = vadd.f32 %v437, %v598
      %v600 = vpop.f32.mrb[0].mxu0
      %v601 = vadd.f32 %v439, %v600
      %602 = vdwg.mxu0
      %v603 = vand.u32 %v237, 4294901760
      %v604 = vsub.f32 %v237, %v603
      %605 = vmatprep.subr.mxu0 %v604
      %v606 = vand.u32 %v236, 4294901760
      %v607 = vsub.f32 %v236, %v606
      %608 = vmatpush1.msra.mxu0 %v607
      %v609 = vand.u32 %v329, 4294901760
      %v610 = vsub.f32 %v329, %v609
      %611 = vmatprep.subr.mxu0 %v610
      %v612 = vand.u32 %v328, 4294901760
      %v613 = vsub.f32 %v328, %v612
      %614 = vmatpush1.msra.mxu0 %v613
      %v615 = vand.u32 %v262, 4294901760
      %v616 = vsub.f32 %v262, %v615
      %617 = vmatprep.subr.mxu0 %v616
      %v618 = vand.u32 %v261, 4294901760
      %v619 = vsub.f32 %v261, %v618
      %620 = vmatpush1.msra.mxu0 %v619
      %v621 = vand.u32 %v275, 4294901760
      %v622 = vsub.f32 %v275, %v621
      %623 = vmatprep.subr.mxu0 %v622
      %v624 = vand.u32 %v274, 4294901760
      %v625 = vsub.f32 %v274, %v624
      %626 = vmatpush1.msra.mxu0 %v625
      %v627 = vand.u32 %v209, 4294901760
      %v628 = vsub.f32 %v209, %v627
      %629 = vmatprep.subr.mxu0 %v628
      %v630 = vand.u32 %v208, 4294901760
      %v631 = vsub.f32 %v208, %v630
      %632 = vmatpush1.msra.mxu0 %v631
      %v633 = vand.u32 %v294, 4294901760
      %v634 = vsub.f32 %v294, %v633
      %635 = vmatprep.subr.mxu0 %v634
      %v636 = vand.u32 %v293, 4294901760
      %v637 = vsub.f32 %v293, %v636
      %638 = vmatpush1.msra.mxu0 %v637
      %v639 = vand.u32 %v307, 4294901760
      %v640 = vsub.f32 %v307, %v639
      %641 = vmatprep.subr.mxu0 %v640
      %v642 = vand.u32 %v306, 4294901760
      %v643 = vsub.f32 %v306, %v642
      %644 = vmatpush1.msra.mxu0 %v643
      %v645 = vand.u32 %v340, 4294901760
      %v646 = vsub.f32 %v340, %v645
      %647 = vmatprep.subr.mxu0 %v646
      %v648 = vand.u32 %v339, 4294901760
      %v649 = vsub.f32 %v339, %v648
      %650 = vmatpush1.msra.mxu0 %v649
      %v651 = vand.u32 %v320, 4294901760
      %v652 = vsub.f32 %v320, %v651
      %653 = vmatprep.subr.mxu0 %v652
      %v654 = vand.u32 %v319, 4294901760
      %v655 = vsub.f32 %v319, %v654
      %656 = vmatpush1.msra.mxu0 %v655
      %657 = vmatprep.subr.mxu0 0.0
      %658 = vmatpush1.msra.mxu0 0.0
      %659 = vmatprep.subr.mxu0 0.0
      %660 = vmatpush1.msra.mxu0 0.0
      %661 = vmatprep.subr.mxu0 0.0
      %662 = vmatpush1.msra.mxu0 0.0
      %663 = vmatprep.subr.mxu0 0.0
      %664 = vmatpush1.msra.mxu0 0.0
      %665 = vmatprep.subr.mxu0 0.0
      %666 = vmatpush1.msra.mxu0 0.0
      %667 = vmatprep.subr.mxu0 0.0
      %668 = vmatpush1.msra.mxu0 0.0
      %669 = vmatprep.subr.mxu0 0.0
      %670 = vmatpush1.msra.mxu0 0.0
      %671 = vmatprep.subr.mxu0 0.0
      %672 = vmatpush1.msra.mxu0 0.0
      %673 = vmatprep.subr.mxu0 0.0
      %674 = vmatpush1.msra.mxu0 0.0
      %675 = vmatprep.subr.mxu0 0.0
      %676 = vmatpush1.msra.mxu0 0.0
      %677 = vmatprep.subr.mxu0 0.0
      %678 = vmatpush1.msra.mxu0 0.0
      %679 = vmatprep.subr.mxu0 0.0
      %680 = vmatpush1.msra.mxu0 0.0
      %681 = vmatprep.subr.mxu0 0.0
      %682 = vmatpush1.msra.mxu0 0.0
      %683 = vmatprep.subr.mxu0 0.0
      %684 = vmatpush1.msra.mxu0 0.0
      %685 = vmatprep.subr.mxu0 0.0
      %686 = vmatpush1.msra.mxu0 0.0
      %687 = vmatprep.subr.mxu0 0.0
      %688 = vmatpush1.msra.mxu0 0.0
      %689 = vmatprep.subr.mxu0 0.0
      %690 = vmatpush1.msra.mxu0 0.0
      %691 = vmatprep.subr.mxu0 0.0
      %692 = vmatpush1.msra.mxu0 0.0
      %693 = vmatprep.subr.mxu0 0.0
      %694 = vmatpush1.msra.mxu0 0.0
      %695 = vmatprep.subr.mxu0 0.0
      %696 = vmatpush1.msra.mxu0 0.0
      %697 = vmatprep.subr.mxu0 0.0
      %698 = vmatpush1.msra.mxu0 0.0
      %699 = vmatprep.subr.mxu0 0.0
      %700 = vmatpush1.msra.mxu0 0.0
      %701 = vmatprep.subr.mxu0 0.0
      %702 = vmatpush1.msra.mxu0 0.0
      %703 = vmatprep.mubr.f32.mxu0 0.0
      %v704 = vand.u32 %v345, 4294901760
      %v705 = vsub.f32 %v345, %v704
      %706 = vmatmul.mubr.f32.gmra.mrb[0].mxu0 %v705
      %v707 = vpop.f32.mrb[0].mxu0
      %v708 = vadd.f32 %v599, %v707
      %v709 = vpop.f32.mrb[0].mxu0
      %v710 = vadd.f32 %v601, %v709
      %711 = vdwg.mxu0
      %v712 = vand.u32 %v237, 4294901760
      %713 = vmatprep.subr.mxu0 %v712
      %v714 = vand.u32 %v236, 4294901760
      %715 = vmatpush1.msra.mxu0 %v714
      %v716 = vand.u32 %v329, 4294901760
      %717 = vmatprep.subr.mxu0 %v716
      %v718 = vand.u32 %v328, 4294901760
      %719 = vmatpush1.msra.mxu0 %v718
      %v720 = vand.u32 %v262, 4294901760
      %721 = vmatprep.subr.mxu0 %v720
      %v722 = vand.u32 %v261, 4294901760
      %723 = vmatpush1.msra.mxu0 %v722
      %v724 = vand.u32 %v275, 4294901760
      %725 = vmatprep.subr.mxu0 %v724
      %v726 = vand.u32 %v274, 4294901760
      %727 = vmatpush1.msra.mxu0 %v726
      %v728 = vand.u32 %v209, 4294901760
      %729 = vmatprep.subr.mxu0 %v728
      %v730 = vand.u32 %v208, 4294901760
      %731 = vmatpush1.msra.mxu0 %v730
      %v732 = vand.u32 %v294, 4294901760
      %733 = vmatprep.subr.mxu0 %v732
      %v734 = vand.u32 %v293, 4294901760
      %735 = vmatpush1.msra.mxu0 %v734
      %v736 = vand.u32 %v307, 4294901760
      %737 = vmatprep.subr.mxu0 %v736
      %v738 = vand.u32 %v306, 4294901760
      %739 = vmatpush1.msra.mxu0 %v738
      %v740 = vand.u32 %v340, 4294901760
      %741 = vmatprep.subr.mxu0 %v740
      %v742 = vand.u32 %v339, 4294901760
      %743 = vmatpush1.msra.mxu0 %v742
      %v744 = vand.u32 %v320, 4294901760
      %745 = vmatprep.subr.mxu0 %v744
      %v746 = vand.u32 %v319, 4294901760
      %747 = vmatpush1.msra.mxu0 %v746
      %748 = vmatprep.subr.mxu0 0.0
      %749 = vmatpush1.msra.mxu0 0.0
      %750 = vmatprep.subr.mxu0 0.0
      %751 = vmatpush1.msra.mxu0 0.0
      %752 = vmatprep.subr.mxu0 0.0
      %753 = vmatpush1.msra.mxu0 0.0
      %754 = vmatprep.subr.mxu0 0.0
      %755 = vmatpush1.msra.mxu0 0.0
      %756 = vmatprep.subr.mxu0 0.0
      %757 = vmatpush1.msra.mxu0 0.0
      %758 = vmatprep.subr.mxu0 0.0
      %759 = vmatpush1.msra.mxu0 0.0
      %760 = vmatprep.subr.mxu0 0.0
      %761 = vmatpush1.msra.mxu0 0.0
      %762 = vmatprep.subr.mxu0 0.0
      %763 = vmatpush1.msra.mxu0 0.0
      %764 = vmatprep.subr.mxu0 0.0
      %765 = vmatpush1.msra.mxu0 0.0
      %766 = vmatprep.subr.mxu0 0.0
      %767 = vmatpush1.msra.mxu0 0.0
      %768 = vmatprep.subr.mxu0 0.0
      %769 = vmatpush1.msra.mxu0 0.0
      %770 = vmatprep.subr.mxu0 0.0
      %771 = vmatpush1.msra.mxu0 0.0
      %772 = vmatprep.subr.mxu0 0.0
      %773 = vmatpush1.msra.mxu0 0.0
      %774 = vmatprep.subr.mxu0 0.0
      %775 = vmatpush1.msra.mxu0 0.0
      %776 = vmatprep.subr.mxu0 0.0
      %777 = vmatpush1.msra.mxu0 0.0
      %778 = vmatprep.subr.mxu0 0.0
      %779 = vmatpush1.msra.mxu0 0.0
      %780 = vmatprep.subr.mxu0 0.0
      %781 = vmatpush1.msra.mxu0 0.0
      %782 = vmatprep.subr.mxu0 0.0
      %783 = vmatpush1.msra.mxu0 0.0
      %784 = vmatprep.subr.mxu0 0.0
      %785 = vmatpush1.msra.mxu0 0.0
      %786 = vmatprep.subr.mxu0 0.0
      %787 = vmatpush1.msra.mxu0 0.0
      %788 = vmatprep.subr.mxu0 0.0
      %789 = vmatpush1.msra.mxu0 0.0
      %790 = vmatprep.subr.mxu0 0.0
      %791 = vmatpush1.msra.mxu0 0.0
      %792 = vmatprep.subr.mxu0 0.0
      %793 = vmatpush1.msra.mxu0 0.0
      %794 = vmatprep.mubr.f32.mxu0 0.0
      %v795 = vand.u32 %v345, 4294901760
      %v796 = vsub.f32 %v345, %v795
      %v797 = vand.u32 %v796, 4294901760
      %798 = vmatmul.mubr.f32.gmra.mrb[0].mxu0 %v797
      %v799 = vpop.f32.mrb[0].mxu0
      %v800 = vadd.f32 %v708, %v799
      %v801 = vpop.f32.mrb[0].mxu0
      %v802 = vadd.f32 %v710, %v801
      %803 = vdwg.mxu0
      %v804 = vand.u32 %v237, 4294901760
      %v805 = vsub.f32 %v237, %v804
      %v806 = vand.u32 %v805, 4294901760
      %807 = vmatprep.subr.mxu0 %v806
      %v808 = vand.u32 %v236, 4294901760
      %v809 = vsub.f32 %v236, %v808
      %v810 = vand.u32 %v809, 4294901760
      %811 = vmatpush1.msra.mxu0 %v810
      %v812 = vand.u32 %v329, 4294901760
      %v813 = vsub.f32 %v329, %v812
      %v814 = vand.u32 %v813, 4294901760
      %815 = vmatprep.subr.mxu0 %v814
      %v816 = vand.u32 %v328, 4294901760
      %v817 = vsub.f32 %v328, %v816
      %v818 = vand.u32 %v817, 4294901760
      %819 = vmatpush1.msra.mxu0 %v818
      %v820 = vand.u32 %v262, 4294901760
      %v821 = vsub.f32 %v262, %v820
      %v822 = vand.u32 %v821, 4294901760
      %823 = vmatprep.subr.mxu0 %v822
      %v824 = vand.u32 %v261, 4294901760
      %v825 = vsub.f32 %v261, %v824
      %v826 = vand.u32 %v825, 4294901760
      %827 = vmatpush1.msra.mxu0 %v826
      %v828 = vand.u32 %v275, 4294901760
      %v829 = vsub.f32 %v275, %v828
      %v830 = vand.u32 %v829, 4294901760
      %831 = vmatprep.subr.mxu0 %v830
      %v832 = vand.u32 %v274, 4294901760
      %v833 = vsub.f32 %v274, %v832
      %v834 = vand.u32 %v833, 4294901760
      %835 = vmatpush1.msra.mxu0 %v834
      %v836 = vand.u32 %v209, 4294901760
      %v837 = vsub.f32 %v209, %v836
      %v838 = vand.u32 %v837, 4294901760
      %839 = vmatprep.subr.mxu0 %v838
      %v840 = vand.u32 %v208, 4294901760
      %v841 = vsub.f32 %v208, %v840
      %v842 = vand.u32 %v841, 4294901760
      %843 = vmatpush1.msra.mxu0 %v842
      %v844 = vand.u32 %v294, 4294901760
      %v845 = vsub.f32 %v294, %v844
      %v846 = vand.u32 %v845, 4294901760
      %847 = vmatprep.subr.mxu0 %v846
      %v848 = vand.u32 %v293, 4294901760
      %v849 = vsub.f32 %v293, %v848
      %v850 = vand.u32 %v849, 4294901760
      %851 = vmatpush1.msra.mxu0 %v850
      %v852 = vand.u32 %v307, 4294901760
      %v853 = vsub.f32 %v307, %v852
      %v854 = vand.u32 %v853, 4294901760
      %855 = vmatprep.subr.mxu0 %v854
      %v856 = vand.u32 %v306, 4294901760
      %v857 = vsub.f32 %v306, %v856
      %v858 = vand.u32 %v857, 4294901760
      %859 = vmatpush1.msra.mxu0 %v858
      %v860 = vand.u32 %v340, 4294901760
      %v861 = vsub.f32 %v340, %v860
      %v862 = vand.u32 %v861, 4294901760
      %863 = vmatprep.subr.mxu0 %v862
      %v864 = vand.u32 %v339, 4294901760
      %v865 = vsub.f32 %v339, %v864
      %v866 = vand.u32 %v865, 4294901760
      %867 = vmatpush1.msra.mxu0 %v866
      %v868 = vand.u32 %v320, 4294901760
      %v869 = vsub.f32 %v320, %v868
      %v870 = vand.u32 %v869, 4294901760
      %871 = vmatprep.subr.mxu0 %v870
      %v872 = vand.u32 %v319, 4294901760
      %v873 = vsub.f32 %v319, %v872
      %v874 = vand.u32 %v873, 4294901760
      %875 = vmatpush1.msra.mxu0 %v874
      %876 = vmatprep.subr.mxu0 0.0
      %877 = vmatpush1.msra.mxu0 0.0
      %878 = vmatprep.subr.mxu0 0.0
      %879 = vmatpush1.msra.mxu0 0.0
      %880 = vmatprep.subr.mxu0 0.0
      %881 = vmatpush1.msra.mxu0 0.0
      %882 = vmatprep.subr.mxu0 0.0
      %883 = vmatpush1.msra.mxu0 0.0
      %884 = vmatprep.subr.mxu0 0.0
      %885 = vmatpush1.msra.mxu0 0.0
      %886 = vmatprep.subr.mxu0 0.0
      %887 = vmatpush1.msra.mxu0 0.0
      %888 = vmatprep.subr.mxu0 0.0
      %889 = vmatpush1.msra.mxu0 0.0
      %890 = vmatprep.subr.mxu0 0.0
      %891 = vmatpush1.msra.mxu0 0.0
      %892 = vmatprep.subr.mxu0 0.0
      %893 = vmatpush1.msra.mxu0 0.0
      %894 = vmatprep.subr.mxu0 0.0
      %895 = vmatpush1.msra.mxu0 0.0
      %896 = vmatprep.subr.mxu0 0.0
      %897 = vmatpush1.msra.mxu0 0.0
      %898 = vmatprep.subr.mxu0 0.0
      %899 = vmatpush1.msra.mxu0 0.0
      %900 = vmatprep.subr.mxu0 0.0
      %901 = vmatpush1.msra.mxu0 0.0
      %902 = vmatprep.subr.mxu0 0.0
      %903 = vmatpush1.msra.mxu0 0.0
      %904 = vmatprep.subr.mxu0 0.0
      %905 = vmatpush1.msra.mxu0 0.0
      %906 = vmatprep.subr.mxu0 0.0
      %907 = vmatpush1.msra.mxu0 0.0
      %908 = vmatprep.subr.mxu0 0.0
      %909 = vmatpush1.msra.mxu0 0.0
      %910 = vmatprep.subr.mxu0 0.0
      %911 = vmatpush1.msra.mxu0 0.0
      %912 = vmatprep.subr.mxu0 0.0
      %913 = vmatpush1.msra.mxu0 0.0
      %914 = vmatprep.subr.mxu0 0.0
      %915 = vmatpush1.msra.mxu0 0.0
      %916 = vmatprep.subr.mxu0 0.0
      %917 = vmatpush1.msra.mxu0 0.0
      %918 = vmatprep.subr.mxu0 0.0
      %919 = vmatpush1.msra.mxu0 0.0
      %920 = vmatprep.subr.mxu0 0.0
      %921 = vmatpush1.msra.mxu0 0.0
      %922 = vmatprep.mubr.f32.mxu0 0.0
      %v923 = vand.u32 %v345, 4294901760
      %924 = vmatmul.mubr.f32.gmra.mrb[0].mxu0 %v923
      %v925 = vpop.f32.mrb[0].mxu0
      %v926 = vadd.f32 %v800, %v925
      %v927 = vpop.f32.mrb[0].mxu0
      %v928 = vadd.f32 %v802, %v927
      %929 = vdwg.mxu0
      %v930 = vand.u32 %v237, 4294901760
      %931 = vmatprep.subr.mxu0 %v930
      %v932 = vand.u32 %v236, 4294901760
      %933 = vmatpush1.msra.mxu0 %v932
      %v934 = vand.u32 %v329, 4294901760
      %935 = vmatprep.subr.mxu0 %v934
      %v936 = vand.u32 %v328, 4294901760
      %937 = vmatpush1.msra.mxu0 %v936
      %v938 = vand.u32 %v262, 4294901760
      %939 = vmatprep.subr.mxu0 %v938
      %v940 = vand.u32 %v261, 4294901760
      %941 = vmatpush1.msra.mxu0 %v940
      %v942 = vand.u32 %v275, 4294901760
      %943 = vmatprep.subr.mxu0 %v942
      %v944 = vand.u32 %v274, 4294901760
      %945 = vmatpush1.msra.mxu0 %v944
      %v946 = vand.u32 %v209, 4294901760
      %947 = vmatprep.subr.mxu0 %v946
      %v948 = vand.u32 %v208, 4294901760
      %949 = vmatpush1.msra.mxu0 %v948
      %v950 = vand.u32 %v294, 4294901760
      %951 = vmatprep.subr.mxu0 %v950
      %v952 = vand.u32 %v293, 4294901760
      %953 = vmatpush1.msra.mxu0 %v952
      %v954 = vand.u32 %v307, 4294901760
      %955 = vmatprep.subr.mxu0 %v954
      %v956 = vand.u32 %v306, 4294901760
      %957 = vmatpush1.msra.mxu0 %v956
      %v958 = vand.u32 %v340, 4294901760
      %959 = vmatprep.subr.mxu0 %v958
      %v960 = vand.u32 %v339, 4294901760
      %961 = vmatpush1.msra.mxu0 %v960
      %v962 = vand.u32 %v320, 4294901760
      %963 = vmatprep.subr.mxu0 %v962
      %v964 = vand.u32 %v319, 4294901760
      %965 = vmatpush1.msra.mxu0 %v964
      %966 = vmatprep.subr.mxu0 0.0
      %967 = vmatpush1.msra.mxu0 0.0
      %968 = vmatprep.subr.mxu0 0.0
      %969 = vmatpush1.msra.mxu0 0.0
      %970 = vmatprep.subr.mxu0 0.0
      %971 = vmatpush1.msra.mxu0 0.0
      %972 = vmatprep.subr.mxu0 0.0
      %973 = vmatpush1.msra.mxu0 0.0
      %974 = vmatprep.subr.mxu0 0.0
      %975 = vmatpush1.msra.mxu0 0.0
      %976 = vmatprep.subr.mxu0 0.0
      %977 = vmatpush1.msra.mxu0 0.0
      %978 = vmatprep.subr.mxu0 0.0
      %979 = vmatpush1.msra.mxu0 0.0
      %980 = vmatprep.subr.mxu0 0.0
      %981 = vmatpush1.msra.mxu0 0.0
      %982 = vmatprep.subr.mxu0 0.0
      %983 = vmatpush1.msra.mxu0 0.0
      %984 = vmatprep.subr.mxu0 0.0
      %985 = vmatpush1.msra.mxu0 0.0
      %986 = vmatprep.subr.mxu0 0.0
      %987 = vmatpush1.msra.mxu0 0.0
      %988 = vmatprep.subr.mxu0 0.0
      %989 = vmatpush1.msra.mxu0 0.0
      %990 = vmatprep.subr.mxu0 0.0
      %991 = vmatpush1.msra.mxu0 0.0
      %992 = vmatprep.subr.mxu0 0.0
      %993 = vmatpush1.msra.mxu0 0.0
      %994 = vmatprep.subr.mxu0 0.0
      %995 = vmatpush1.msra.mxu0 0.0
      %996 = vmatprep.subr.mxu0 0.0
      %997 = vmatpush1.msra.mxu0 0.0
      %998 = vmatprep.subr.mxu0 0.0
      %999 = vmatpush1.msra.mxu0 0.0
      %1000 = vmatprep.subr.mxu0 0.0
      %1001 = vmatpush1.msra.mxu0 0.0
      %1002 = vmatprep.subr.mxu0 0.0
      %1003 = vmatpush1.msra.mxu0 0.0
      %1004 = vmatprep.subr.mxu0 0.0
      %1005 = vmatpush1.msra.mxu0 0.0
      %1006 = vmatprep.subr.mxu0 0.0
      %1007 = vmatpush1.msra.mxu0 0.0
      %1008 = vmatprep.subr.mxu0 0.0
      %1009 = vmatpush1.msra.mxu0 0.0
      %1010 = vmatprep.subr.mxu0 0.0
      %1011 = vmatpush1.msra.mxu0 0.0
      %1012 = vmatprep.mubr.f32.mxu0 0.0
      %v1013 = vand.u32 %v345, 4294901760
      %1014 = vmatmul.mubr.f32.gmra.mrb[0].mxu0 %v1013
      %v1015 = vpop.f32.mrb[0].mxu0
      %v1016 = vadd.f32 %v926, %v1015
      %v1017 = vpop.f32.mrb[0].mxu0
      %v1018 = vadd.f32 %v928, %v1017
      %1019 = vdwg.mxu0
      %v1020 = vadd.f32 %v1016, %v1018
      %1021 = vadd.xlane.f32.xlu0 %v1020
      %v1022 = vpop.xlane.xlu0 %1021
      %v1023 = vrcp.pop 256.0
      %v1024 = vmul.f32 %v1022, %v1023
      %v1025 = vsub.f32 %v1016, %v1024
      %v1026 = vsub.f32 %v1018, %v1024
      %v1027 = vmul.f32 %v1025, %v1025
      %v1028 = vmul.f32 %v1026, %v1026
      %v1029 = vadd.f32 %v1027, %v1028
      %1030 = vadd.xlane.f32.xlu0 %v1029
      %v1031 = vpop.xlane.xlu0 %1030
      %v1032 = vmul.f32 %v1031, %v1023
      %v1033 = vadd.f32 %v1032, 1e-05
      %v1034 = vrsqrt.pop %v1033
      %v1035 = vmul.f32 %v1025, %v1034
      %v1036 = vmul.f32 %v1026, %v1034
      %v1037 = vmax.f32 %v1035, 0.0
      %v1038 = vmax.f32 %v1036, 0.0
      %v1039 = vld [vmem:[%s2] sm:$0xff]
      %1040 = vst [vmem:[#allocation2] sm:$0xff] 0.0
      %1041 = vst [vmem:[#allocation2 + $0x8] sm:$0xff] 0.0
      %1042 = vst [vmem:[#allocation2 + $0x10] sm:$0xff] 0.0
      %1043 = vst [vmem:[#allocation2 + $0x18] sm:$0xff] 0.0
      %1044 = vst [vmem:[#allocation2 + $0x8] sm:$0xff] %v1037
      %1045 = vst [vmem:[#allocation2 + $0x10] sm:$0xff] %v1038
      %v1046 = vld [vmem:[#allocation2] sm:$0xff]
      %v1047 = vld [vmem:[#allocation2 + $0x8] sm:$0xff]
      %v1048 = vld [vmem:[#allocation2 + $0x10] sm:$0xff]
      %1052 = vrot.lane.b32.xlu0 %v1046, 17
      %v1053 = vpop.permute.xlu0 %1052
      %1054 = vrot.lane.b32.xlu0 %v1047, 17
      %v1055 = vpop.permute.xlu0 %1054
      %1056 = vrot.lane.b32.xlu0 %v1048, 17
      %v1057 = vpop.permute.xlu0 %1056
      %v1058 = vsel %vm231, %v1053, %v1055
      %v1059 = vsel %vm231, %v1055, %v1057
      %v1062 = vsel %vm220, %v1058, 0.0
      %v1063 = vsel %vm221, %v1059, 0.0
      %1064 = vrot.lane.b32.xlu0 %v1046, 15
      %v1065 = vpop.permute.xlu0 %1064
      %1066 = vrot.lane.b32.xlu0 %v1047, 15
      %v1067 = vpop.permute.xlu0 %1066
      %1068 = vrot.lane.b32.xlu0 %v1048, 15
      %v1069 = vpop.permute.xlu0 %1068
      %v1070 = vsel %vm256, %v1065, %v1067
      %v1071 = vsel %vm256, %v1067, %v1069
      %v1074 = vsel %vm248, %v1070, 0.0
      %v1075 = vsel %vm249, %v1071, 0.0
      %1076 = vrot.lane.b32.xlu0 %v1046, 1
      %v1077 = vpop.permute.xlu0 %1076
      %1078 = vrot.lane.b32.xlu0 %v1047, 1
      %v1079 = vpop.permute.xlu0 %1078
      %1080 = vrot.lane.b32.xlu0 %v1048, 1
      %v1081 = vpop.permute.xlu0 %1080
      %v1082 = vsel %vm269, %v1077, %v1079
      %v1083 = vsel %vm269, %v1079, %v1081
      %v1086 = vsel %vm220, %v1082, 0.0
      %v1087 = vsel %vm221, %v1083, 0.0
      %v1088 = vld [vmem:[#allocation2 + $0x8] sm:$0xff]
      %v1089 = vld [vmem:[#allocation2 + $0x10] sm:$0xff]
      %v1090 = vld [vmem:[#allocation2 + $0x18] sm:$0xff]
      %1094 = vrot.lane.b32.xlu0 %v1088, 127
      %v1095 = vpop.permute.xlu0 %1094
      %1096 = vrot.lane.b32.xlu0 %v1089, 127
      %v1097 = vpop.permute.xlu0 %1096
      %1098 = vrot.lane.b32.xlu0 %v1090, 127
      %v1099 = vpop.permute.xlu0 %1098
      %v1100 = vsel %vm288, %v1095, %v1097
      %v1101 = vsel %vm288, %v1097, %v1099
      %v1104 = vsel %vm248, %v1100, 0.0
      %v1105 = vsel %vm249, %v1101, 0.0
      %1106 = vrot.lane.b32.xlu0 %v1088, 113
      %v1107 = vpop.permute.xlu0 %1106
      %1108 = vrot.lane.b32.xlu0 %v1089, 113
      %v1109 = vpop.permute.xlu0 %1108
      %1110 = vrot.lane.b32.xlu0 %v1090, 113
      %v1111 = vpop.permute.xlu0 %1110
      %v1112 = vsel %vm301, %v1107, %v1109
      %v1113 = vsel %vm301, %v1109, %v1111
      %v1116 = vsel %vm220, %v1112, 0.0
      %v1117 = vsel %vm221, %v1113, 0.0
      %1118 = vrot.lane.b32.xlu0 %v1088, 111
      %v1119 = vpop.permute.xlu0 %1118
      %1120 = vrot.lane.b32.xlu0 %v1089, 111
      %v1121 = vpop.permute.xlu0 %1120
      %1122 = vrot.lane.b32.xlu0 %v1090, 111
      %v1123 = vpop.permute.xlu0 %1122
      %v1124 = vsel %vm314, %v1119, %v1121
      %v1125 = vsel %vm314, %v1121, %v1123
      %v1128 = vsel %vm248, %v1124, 0.0
      %v1129 = vsel %vm249, %v1125, 0.0
      %1130 = vrot.lane.b32.xlu0 %v1046, 16
      %v1131 = vpop.permute.xlu0 %1130
      %1132 = vrot.lane.b32.xlu0 %v1047, 16
      %v1133 = vpop.permute.xlu0 %1132
      %1134 = vrot.lane.b32.xlu0 %v1048, 16
      %v1135 = vpop.permute.xlu0 %1134
      %v1136 = vsel %vm327, %v1131, %v1133
      %v1137 = vsel %vm327, %v1133, %v1135
      %1140 = vrot.lane.b32.xlu0 %v1088, 112
      %v1141 = vpop.permute.xlu0 %1140
      %1142 = vrot.lane.b32.xlu0 %v1089, 112
      %v1143 = vpop.permute.xlu0 %1142
      %1144 = vrot.lane.b32.xlu0 %v1090, 112
      %v1145 = vpop.permute.xlu0 %1144
      %v1146 = vsel %vm338, %v1141, %v1143
      %v1147 = vsel %vm338, %v1143, %v1145
      %v1151 = vsel %vm343, %v1039, 0
      %v1153 = vand.u32 %v1063, 4294901760
      %1154 = vmatprep.subr.mxu0 %v1153
      %v1155 = vand.u32 %v1062, 4294901760
      %1156 = vmatpush1.msra.mxu0 %v1155
      %v1157 = vand.u32 %v1137, 4294901760
      %1158 = vmatprep.subr.mxu0 %v1157
      %v1159 = vand.u32 %v1136, 4294901760
      %1160 = vmatpush1.msra.mxu0 %v1159
      %v1161 = vand.u32 %v1075, 4294901760
      %1162 = vmatprep.subr.mxu0 %v1161
      %v1163 = vand.u32 %v1074, 4294901760
      %1164 = vmatpush1.msra.mxu0 %v1163
      %v1165 = vand.u32 %v1087, 4294901760
      %1166 = vmatprep.subr.mxu0 %v1165
      %v1167 = vand.u32 %v1086, 4294901760
      %1168 = vmatpush1.msra.mxu0 %v1167
      %v1169 = vand.u32 %v1048, 4294901760
      %1170 = vmatprep.subr.mxu0 %v1169
      %v1171 = vand.u32 %v1047, 4294901760
      %1172 = vmatpush1.msra.mxu0 %v1171
      %v1173 = vand.u32 %v1105, 4294901760
      %1174 = vmatprep.subr.mxu0 %v1173
      %v1175 = vand.u32 %v1104, 4294901760
      %1176 = vmatpush1.msra.mxu0 %v1175
      %v1177 = vand.u32 %v1117, 4294901760
      %1178 = vmatprep.subr.mxu0 %v1177
      %v1179 = vand.u32 %v1116, 4294901760
      %1180 = vmatpush1.msra.mxu0 %v1179
      %v1181 = vand.u32 %v1147, 4294901760
      %1182 = vmatprep.subr.mxu0 %v1181
      %v1183 = vand.u32 %v1146, 4294901760
      %1184 = vmatpush1.msra.mxu0 %v1183
      %v1185 = vand.u32 %v1129, 4294901760
      %1186 = vmatprep.subr.mxu0 %v1185
      %v1187 = vand.u32 %v1128, 4294901760
      %1188 = vmatpush1.msra.mxu0 %v1187
      %1189 = vmatprep.subr.mxu0 0.0
      %1190 = vmatpush1.msra.mxu0 0.0
      %1191 = vmatprep.subr.mxu0 0.0
      %1192 = vmatpush1.msra.mxu0 0.0
      %1193 = vmatprep.subr.mxu0 0.0
      %1194 = vmatpush1.msra.mxu0 0.0
      %1195 = vmatprep.subr.mxu0 0.0
      %1196 = vmatpush1.msra.mxu0 0.0
      %1197 = vmatprep.subr.mxu0 0.0
      %1198 = vmatpush1.msra.mxu0 0.0
      %1199 = vmatprep.subr.mxu0 0.0
      %1200 = vmatpush1.msra.mxu0 0.0
      %1201 = vmatprep.subr.mxu0 0.0
      %1202 = vmatpush1.msra.mxu0 0.0
      %1203 = vmatprep.subr.mxu0 0.0
      %1204 = vmatpush1.msra.mxu0 0.0
      %1205 = vmatprep.subr.mxu0 0.0
      %1206 = vmatpush1.msra.mxu0 0.0
      %1207 = vmatprep.subr.mxu0 0.0
      %1208 = vmatpush1.msra.mxu0 0.0
      %1209 = vmatprep.subr.mxu0 0.0
      %1210 = vmatpush1.msra.mxu0 0.0
      %1211 = vmatprep.subr.mxu0 0.0
      %1212 = vmatpush1.msra.mxu0 0.0
      %1213 = vmatprep.subr.mxu0 0.0
      %1214 = vmatpush1.msra.mxu0 0.0
      %1215 = vmatprep.subr.mxu0 0.0
      %1216 = vmatpush1.msra.mxu0 0.0
      %1217 = vmatprep.subr.mxu0 0.0
      %1218 = vmatpush1.msra.mxu0 0.0
      %1219 = vmatprep.subr.mxu0 0.0
      %1220 = vmatpush1.msra.mxu0 0.0
      %1221 = vmatprep.subr.mxu0 0.0
      %1222 = vmatpush1.msra.mxu0 0.0
      %1223 = vmatprep.subr.mxu0 0.0
      %1224 = vmatpush1.msra.mxu0 0.0
      %1225 = vmatprep.subr.mxu0 0.0
      %1226 = vmatpush1.msra.mxu0 0.0
      %1227 = vmatprep.subr.mxu0 0.0
      %1228 = vmatpush1.msra.mxu0 0.0
      %1229 = vmatprep.subr.mxu0 0.0
      %1230 = vmatpush1.msra.mxu0 0.0
      %1231 = vmatprep.subr.mxu0 0.0
      %1232 = vmatpush1.msra.mxu0 0.0
      %1233 = vmatprep.subr.mxu0 0.0
      %1234 = vmatpush1.msra.mxu0 0.0
      %1235 = vmatprep.mubr.f32.mxu0 0.0
      %v1236 = vand.u32 %v1151, 4294901760
      %v1237 = vsub.f32 %v1151, %v1236
      %v1238 = vand.u32 %v1237, 4294901760
      %v1239 = vsub.f32 %v1237, %v1238
      %v1240 = vand.u32 %v1239, 4294901760
      %1241 = vmatmul.mubr.f32.gmra.mrb[0].mxu0 %v1240
      %v1242 = vpop.f32.mrb[0].mxu0
      %v1243 = vadd.f32 0.0, %v1242
      %v1244 = vpop.f32.mrb[0].mxu0
      %v1245 = vadd.f32 0.0, %v1244
      %1246 = vdwg.mxu0
      %v1247 = vand.u32 %v1063, 4294901760
      %v1248 = vsub.f32 %v1063, %v1247
      %v1249 = vand.u32 %v1248, 4294901760
      %v1250 = vsub.f32 %v1248, %v1249
      %v1251 = vand.u32 %v1250, 4294901760
      %1252 = vmatprep.subr.mxu0 %v1251
      %v1253 = vand.u32 %v1062, 4294901760
      %v1254 = vsub.f32 %v1062, %v1253
      %v1255 = vand.u32 %v1254, 4294901760
      %v1256 = vsub.f32 %v1254, %v1255
      %v1257 = vand.u32 %v1256, 4294901760
      %1258 = vmatpush1.msra.mxu0 %v1257
      %v1259 = vand.u32 %v1137, 4294901760
      %v1260 = vsub.f32 %v1137, %v1259
      %v1261 = vand.u32 %v1260, 4294901760
      %v1262 = vsub.f32 %v1260, %v1261
      %v1263 = vand.u32 %v1262, 4294901760
      %1264 = vmatprep.subr.mxu0 %v1263
      %v1265 = vand.u32 %v1136, 4294901760
      %v1266 = vsub.f32 %v1136, %v1265
      %v1267 = vand.u32 %v1266, 4294901760
      %v1268 = vsub.f32 %v1266, %v1267
      %v1269 = vand.u32 %v1268, 4294901760
      %1270 = vmatpush1.msra.mxu0 %v1269
      %v1271 = vand.u32 %v1075, 4294901760
      %v1272 = vsub.f32 %v1075, %v1271
      %v1273 = vand.u32 %v1272, 4294901760
      %v1274 = vsub.f32 %v1272, %v1273
      %v1275 = vand.u32 %v1274, 4294901760
      %1276 = vmatprep.subr.mxu0 %v1275
      %v1277 = vand.u32 %v1074, 4294901760
      %v1278 = vsub.f32 %v1074, %v1277
      %v1279 = vand.u32 %v1278, 4294901760
      %v1280 = vsub.f32 %v1278, %v1279
      %v1281 = vand.u32 %v1280, 4294901760
      %1282 = vmatpush1.msra.mxu0 %v1281
      %v1283 = vand.u32 %v1087, 4294901760
      %v1284 = vsub.f32 %v1087, %v1283
      %v1285 = vand.u32 %v1284, 4294901760
      %v1286 = vsub.f32 %v1284, %v1285
      %v1287 = vand.u32 %v1286, 4294901760
      %1288 = vmatprep.subr.mxu0 %v1287
      %v1289 = vand.u32 %v1086, 4294901760
      %v1290 = vsub.f32 %v1086, %v1289
      %v1291 = vand.u32 %v1290, 4294901760
      %v1292 = vsub.f32 %v1290, %v1291
      %v1293 = vand.u32 %v1292, 4294901760
      %1294 = vmatpush1.msra.mxu0 %v1293
      %v1295 = vand.u32 %v1048, 4294901760
      %v1296 = vsub.f32 %v1048, %v1295
      %v1297 = vand.u32 %v1296, 4294901760
      %v1298 = vsub.f32 %v1296, %v1297
      %v1299 = vand.u32 %v1298, 4294901760
      %1300 = vmatprep.subr.mxu0 %v1299
      %v1301 = vand.u32 %v1047, 4294901760
      %v1302 = vsub.f32 %v1047, %v1301
      %v1303 = vand.u32 %v1302, 4294901760
      %v1304 = vsub.f32 %v1302, %v1303
      %v1305 = vand.u32 %v1304, 4294901760
      %1306 = vmatpush1.msra.mxu0 %v1305
      %v1307 = vand.u32 %v1105, 4294901760
      %v1308 = vsub.f32 %v1105, %v1307
      %v1309 = vand.u32 %v1308, 4294901760
      %v1310 = vsub.f32 %v1308, %v1309
      %v1311 = vand.u32 %v1310, 4294901760
      %1312 = vmatprep.subr.mxu0 %v1311
      %v1313 = vand.u32 %v1104, 4294901760
      %v1314 = vsub.f32 %v1104, %v1313
      %v1315 = vand.u32 %v1314, 4294901760
      %v1316 = vsub.f32 %v1314, %v1315
      %v1317 = vand.u32 %v1316, 4294901760
      %1318 = vmatpush1.msra.mxu0 %v1317
      %v1319 = vand.u32 %v1117, 4294901760
      %v1320 = vsub.f32 %v1117, %v1319
      %v1321 = vand.u32 %v1320, 4294901760
      %v1322 = vsub.f32 %v1320, %v1321
      %v1323 = vand.u32 %v1322, 4294901760
      %1324 = vmatprep.subr.mxu0 %v1323
      %v1325 = vand.u32 %v1116, 4294901760
      %v1326 = vsub.f32 %v1116, %v1325
      %v1327 = vand.u32 %v1326, 4294901760
      %v1328 = vsub.f32 %v1326, %v1327
      %v1329 = vand.u32 %v1328, 4294901760
      %1330 = vmatpush1.msra.mxu0 %v1329
      %v1331 = vand.u32 %v1147, 4294901760
      %v1332 = vsub.f32 %v1147, %v1331
      %v1333 = vand.u32 %v1332, 4294901760
      %v1334 = vsub.f32 %v1332, %v1333
      %v1335 = vand.u32 %v1334, 4294901760
      %1336 = vmatprep.subr.mxu0 %v1335
      %v1337 = vand.u32 %v1146, 4294901760
      %v1338 = vsub.f32 %v1146, %v1337
      %v1339 = vand.u32 %v1338, 4294901760
      %v1340 = vsub.f32 %v1338, %v1339
      %v1341 = vand.u32 %v1340, 4294901760
      %1342 = vmatpush1.msra.mxu0 %v1341
      %v1343 = vand.u32 %v1129, 4294901760
      %v1344 = vsub.f32 %v1129, %v1343
      %v1345 = vand.u32 %v1344, 4294901760
      %v1346 = vsub.f32 %v1344, %v1345
      %v1347 = vand.u32 %v1346, 4294901760
      %1348 = vmatprep.subr.mxu0 %v1347
      %v1349 = vand.u32 %v1128, 4294901760
      %v1350 = vsub.f32 %v1128, %v1349
      %v1351 = vand.u32 %v1350, 4294901760
      %v1352 = vsub.f32 %v1350, %v1351
      %v1353 = vand.u32 %v1352, 4294901760
      %1354 = vmatpush1.msra.mxu0 %v1353
      %1355 = vmatprep.subr.mxu0 0.0
      %1356 = vmatpush1.msra.mxu0 0.0
      %1357 = vmatprep.subr.mxu0 0.0
      %1358 = vmatpush1.msra.mxu0 0.0
      %1359 = vmatprep.subr.mxu0 0.0
      %1360 = vmatpush1.msra.mxu0 0.0
      %1361 = vmatprep.subr.mxu0 0.0
      %1362 = vmatpush1.msra.mxu0 0.0
      %1363 = vmatprep.subr.mxu0 0.0
      %1364 = vmatpush1.msra.mxu0 0.0
      %1365 = vmatprep.subr.mxu0 0.0
      %1366 = vmatpush1.msra.mxu0 0.0
      %1367 = vmatprep.subr.mxu0 0.0
      %1368 = vmatpush1.msra.mxu0 0.0
      %1369 = vmatprep.subr.mxu0 0.0
      %1370 = vmatpush1.msra.mxu0 0.0
      %1371 = vmatprep.subr.mxu0 0.0
      %1372 = vmatpush1.msra.mxu0 0.0
      %1373 = vmatprep.subr.mxu0 0.0
      %1374 = vmatpush1.msra.mxu0 0.0
      %1375 = vmatprep.subr.mxu0 0.0
      %1376 = vmatpush1.msra.mxu0 0.0
      %1377 = vmatprep.subr.mxu0 0.0
      %1378 = vmatpush1.msra.mxu0 0.0
      %1379 = vmatprep.subr.mxu0 0.0
      %1380 = vmatpush1.msra.mxu0 0.0
      %1381 = vmatprep.subr.mxu0 0.0
      %1382 = vmatpush1.msra.mxu0 0.0
      %1383 = vmatprep.subr.mxu0 0.0
      %1384 = vmatpush1.msra.mxu0 0.0
      %1385 = vmatprep.subr.mxu0 0.0
      %1386 = vmatpush1.msra.mxu0 0.0
      %1387 = vmatprep.subr.mxu0 0.0
      %1388 = vmatpush1.msra.mxu0 0.0
      %1389 = vmatprep.subr.mxu0 0.0
      %1390 = vmatpush1.msra.mxu0 0.0
      %1391 = vmatprep.subr.mxu0 0.0
      %1392 = vmatpush1.msra.mxu0 0.0
      %1393 = vmatprep.subr.mxu0 0.0
      %1394 = vmatpush1.msra.mxu0 0.0
      %1395 = vmatprep.subr.mxu0 0.0
      %1396 = vmatpush1.msra.mxu0 0.0
      %1397 = vmatprep.subr.mxu0 0.0
      %1398 = vmatpush1.msra.mxu0 0.0
      %1399 = vmatprep.subr.mxu0 0.0
      %1400 = vmatpush1.msra.mxu0 0.0
      %1401 = vmatprep.mubr.f32.mxu0 0.0
      %v1402 = vand.u32 %v1151, 4294901760
      %1403 = vmatmul.mubr.f32.gmra.mrb[0].mxu0 %v1402
      %v1404 = vpop.f32.mrb[0].mxu0
      %v1405 = vadd.f32 %v1243, %v1404
      %v1406 = vpop.f32.mrb[0].mxu0
      %v1407 = vadd.f32 %v1245, %v1406
      %1408 = vdwg.mxu0
      %v1409 = vand.u32 %v1063, 4294901760
      %v1410 = vsub.f32 %v1063, %v1409
      %1411 = vmatprep.subr.mxu0 %v1410
      %v1412 = vand.u32 %v1062, 4294901760
      %v1413 = vsub.f32 %v1062, %v1412
      %1414 = vmatpush1.msra.mxu0 %v1413
      %v1415 = vand.u32 %v1137, 4294901760
      %v1416 = vsub.f32 %v1137, %v1415
      %1417 = vmatprep.subr.mxu0 %v1416
      %v1418 = vand.u32 %v1136, 4294901760
      %v1419 = vsub.f32 %v1136, %v1418
      %1420 = vmatpush1.msra.mxu0 %v1419
      %v1421 = vand.u32 %v1075, 4294901760
      %v1422 = vsub.f32 %v1075, %v1421
      %1423 = vmatprep.subr.mxu0 %v1422
      %v1424 = vand.u32 %v1074, 4294901760
      %v1425 = vsub.f32 %v1074, %v1424
      %1426 = vmatpush1.msra.mxu0 %v1425
      %v1427 = vand.u32 %v1087, 4294901760
      %v1428 = vsub.f32 %v1087, %v1427
      %1429 = vmatprep.subr.mxu0 %v1428
      %v1430 = vand.u32 %v1086, 4294901760
      %v1431 = vsub.f32 %v1086, %v1430
      %1432 = vmatpush1.msra.mxu0 %v1431
      %v1433 = vand.u32 %v1048, 4294901760
      %v1434 = vsub.f32 %v1048, %v1433
      %1435 = vmatprep.subr.mxu0 %v1434
      %v1436 = vand.u32 %v1047, 4294901760
      %v1437 = vsub.f32 %v1047, %v1436
      %1438 = vmatpush1.msra.mxu0 %v1437
      %v1439 = vand.u32 %v1105, 4294901760
      %v1440 = vsub.f32 %v1105, %v1439
      %1441 = vmatprep.subr.mxu0 %v1440
      %v1442 = vand.u32 %v1104, 4294901760
      %v1443 = vsub.f32 %v1104, %v1442
      %1444 = vmatpush1.msra.mxu0 %v1443
      %v1445 = vand.u32 %v1117, 4294901760
      %v1446 = vsub.f32 %v1117, %v1445
      %1447 = vmatprep.subr.mxu0 %v1446
      %v1448 = vand.u32 %v1116, 4294901760
      %v1449 = vsub.f32 %v1116, %v1448
      %1450 = vmatpush1.msra.mxu0 %v1449
      %v1451 = vand.u32 %v1147, 4294901760
      %v1452 = vsub.f32 %v1147, %v1451
      %1453 = vmatprep.subr.mxu0 %v1452
      %v1454 = vand.u32 %v1146, 4294901760
      %v1455 = vsub.f32 %v1146, %v1454
      %1456 = vmatpush1.msra.mxu0 %v1455
      %v1457 = vand.u32 %v1129, 4294901760
      %v1458 = vsub.f32 %v1129, %v1457
      %1459 = vmatprep.subr.mxu0 %v1458
      %v1460 = vand.u32 %v1128, 4294901760
      %v1461 = vsub.f32 %v1128, %v1460
      %1462 = vmatpush1.msra.mxu0 %v1461
      %1463 = vmatprep.subr.mxu0 0.0
      %1464 = vmatpush1.msra.mxu0 0.0
      %1465 = vmatprep.subr.mxu0 0.0
      %1466 = vmatpush1.msra.mxu0 0.0
      %1467 = vmatprep.subr.mxu0 0.0
      %1468 = vmatpush1.msra.mxu0 0.0
      %1469 = vmatprep.subr.mxu0 0.0
      %1470 = vmatpush1.msra.mxu0 0.0
      %1471 = vmatprep.subr.mxu0 0.0
      %1472 = vmatpush1.msra.mxu0 0.0
      %1473 = vmatprep.subr.mxu0 0.0
      %1474 = vmatpush1.msra.mxu0 0.0
      %1475 = vmatprep.subr.mxu0 0.0
      %1476 = vmatpush1.msra.mxu0 0.0
      %1477 = vmatprep.subr.mxu0 0.0
      %1478 = vmatpush1.msra.mxu0 0.0
      %1479 = vmatprep.subr.mxu0 0.0
      %1480 = vmatpush1.msra.mxu0 0.0
      %1481 = vmatprep.subr.mxu0 0.0
      %1482 = vmatpush1.msra.mxu0 0.0
      %1483 = vmatprep.subr.mxu0 0.0
      %1484 = vmatpush1.msra.mxu0 0.0
      %1485 = vmatprep.subr.mxu0 0.0
      %1486 = vmatpush1.msra.mxu0 0.0
      %1487 = vmatprep.subr.mxu0 0.0
      %1488 = vmatpush1.msra.mxu0 0.0
      %1489 = vmatprep.subr.mxu0 0.0
      %1490 = vmatpush1.msra.mxu0 0.0
      %1491 = vmatprep.subr.mxu0 0.0
      %1492 = vmatpush1.msra.mxu0 0.0
      %1493 = vmatprep.subr.mxu0 0.0
      %1494 = vmatpush1.msra.mxu0 0.0
      %1495 = vmatprep.subr.mxu0 0.0
      %1496 = vmatpush1.msra.mxu0 0.0
      %1497 = vmatprep.subr.mxu0 0.0
      %1498 = vmatpush1.msra.mxu0 0.0
      %1499 = vmatprep.subr.mxu0 0.0
      %1500 = vmatpush1.msra.mxu0 0.0
      %1501 = vmatprep.subr.mxu0 0.0
      %1502 = vmatpush1.msra.mxu0 0.0
      %1503 = vmatprep.subr.mxu0 0.0
      %1504 = vmatpush1.msra.mxu0 0.0
      %1505 = vmatprep.subr.mxu0 0.0
      %1506 = vmatpush1.msra.mxu0 0.0
      %1507 = vmatprep.subr.mxu0 0.0
      %1508 = vmatpush1.msra.mxu0 0.0
      %1509 = vmatprep.mubr.f32.mxu0 0.0
      %v1510 = vand.u32 %v1151, 4294901760
      %v1511 = vsub.f32 %v1151, %v1510
      %1512 = vmatmul.mubr.f32.gmra.mrb[0].mxu0 %v1511
      %v1513 = vpop.f32.mrb[0].mxu0
      %v1514 = vadd.f32 %v1405, %v1513
      %v1515 = vpop.f32.mrb[0].mxu0
      %v1516 = vadd.f32 %v1407, %v1515
      %1517 = vdwg.mxu0
      %v1518 = vand.u32 %v1063, 4294901760
      %1519 = vmatprep.subr.mxu0 %v1518
      %v1520 = vand.u32 %v1062, 4294901760
      %1521 = vmatpush1.msra.mxu0 %v1520
      %v1522 = vand.u32 %v1137, 4294901760
      %1523 = vmatprep.subr.mxu0 %v1522
      %v1524 = vand.u32 %v1136, 4294901760
      %1525 = vmatpush1.msra.mxu0 %v1524
      %v1526 = vand.u32 %v1075, 4294901760
      %1527 = vmatprep.subr.mxu0 %v1526
      %v1528 = vand.u32 %v1074, 4294901760
      %1529 = vmatpush1.msra.mxu0 %v1528
      %v1530 = vand.u32 %v1087, 4294901760
      %1531 = vmatprep.subr.mxu0 %v1530
      %v1532 = vand.u32 %v1086, 4294901760
      %1533 = vmatpush1.msra.mxu0 %v1532
      %v1534 = vand.u32 %v1048, 4294901760
      %1535 = vmatprep.subr.mxu0 %v1534
      %v1536 = vand.u32 %v1047, 4294901760
      %1537 = vmatpush1.msra.mxu0 %v1536
      %v1538 = vand.u32 %v1105, 4294901760
      %1539 = vmatprep.subr.mxu0 %v1538
      %v1540 = vand.u32 %v1104, 4294901760
      %1541 = vmatpush1.msra.mxu0 %v1540
      %v1542 = vand.u32 %v1117, 4294901760
      %1543 = vmatprep.subr.mxu0 %v1542
      %v1544 = vand.u32 %v1116, 4294901760
      %1545 = vmatpush1.msra.mxu0 %v1544
      %v1546 = vand.u32 %v1147, 4294901760
      %1547 = vmatprep.subr.mxu0 %v1546
      %v1548 = vand.u32 %v1146, 4294901760
      %1549 = vmatpush1.msra.mxu0 %v1548
      %v1550 = vand.u32 %v1129, 4294901760
      %1551 = vmatprep.subr.mxu0 %v1550
      %v1552 = vand.u32 %v1128, 4294901760
      %1553 = vmatpush1.msra.mxu0 %v1552
      %1554 = vmatprep.subr.mxu0 0.0
      %1555 = vmatpush1.msra.mxu0 0.0
      %1556 = vmatprep.subr.mxu0 0.0
      %1557 = vmatpush1.msra.mxu0 0.0
      %1558 = vmatprep.subr.mxu0 0.0
      %1559 = vmatpush1.msra.mxu0 0.0
      %1560 = vmatprep.subr.mxu0 0.0
      %1561 = vmatpush1.msra.mxu0 0.0
      %1562 = vmatprep.subr.mxu0 0.0
      %1563 = vmatpush1.msra.mxu0 0.0
      %1564 = vmatprep.subr.mxu0 0.0
      %1565 = vmatpush1.msra.mxu0 0.0
      %1566 = vmatprep.subr.mxu0 0.0
      %1567 = vmatpush1.msra.mxu0 0.0
      %1568 = vmatprep.subr.mxu0 0.0
      %1569 = vmatpush1.msra.mxu0 0.0
      %1570 = vmatprep.subr.mxu0 0.0
      %1571 = vmatpush1.msra.mxu0 0.0
      %1572 = vmatprep.subr.mxu0 0.0
      %1573 = vmatpush1.msra.mxu0 0.0
      %1574 = vmatprep.subr.mxu0 0.0
      %1575 = vmatpush1.msra.mxu0 0.0
      %1576 = vmatprep.subr.mxu0 0.0
      %1577 = vmatpush1.msra.mxu0 0.0
      %1578 = vmatprep.subr.mxu0 0.0
      %1579 = vmatpush1.msra.mxu0 0.0
      %1580 = vmatprep.subr.mxu0 0.0
      %1581 = vmatpush1.msra.mxu0 0.0
      %1582 = vmatprep.subr.mxu0 0.0
      %1583 = vmatpush1.msra.mxu0 0.0
      %1584 = vmatprep.subr.mxu0 0.0
      %1585 = vmatpush1.msra.mxu0 0.0
      %1586 = vmatprep.subr.mxu0 0.0
      %1587 = vmatpush1.msra.mxu0 0.0
      %1588 = vmatprep.subr.mxu0 0.0
      %1589 = vmatpush1.msra.mxu0 0.0
      %1590 = vmatprep.subr.mxu0 0.0
      %1591 = vmatpush1.msra.mxu0 0.0
      %1592 = vmatprep.subr.mxu0 0.0
      %1593 = vmatpush1.msra.mxu0 0.0
      %1594 = vmatprep.subr.mxu0 0.0
      %1595 = vmatpush1.msra.mxu0 0.0
      %1596 = vmatprep.subr.mxu0 0.0
      %1597 = vmatpush1.msra.mxu0 0.0
      %1598 = vmatprep.subr.mxu0 0.0
      %1599 = vmatpush1.msra.mxu0 0.0
      %1600 = vmatprep.mubr.f32.mxu0 0.0
      %v1601 = vand.u32 %v1151, 4294901760
      %v1602 = vsub.f32 %v1151, %v1601
      %v1603 = vand.u32 %v1602, 4294901760
      %1604 = vmatmul.mubr.f32.gmra.mrb[0].mxu0 %v1603
      %v1605 = vpop.f32.mrb[0].mxu0
      %v1606 = vadd.f32 %v1514, %v1605
      %v1607 = vpop.f32.mrb[0].mxu0
      %v1608 = vadd.f32 %v1516, %v1607
      %1609 = vdwg.mxu0
      %v1610 = vand.u32 %v1063, 4294901760
      %v1611 = vsub.f32 %v1063, %v1610
      %v1612 = vand.u32 %v1611, 4294901760
      %1613 = vmatprep.subr.mxu0 %v1612
      %v1614 = vand.u32 %v1062, 4294901760
      %v1615 = vsub.f32 %v1062, %v1614
      %v1616 = vand.u32 %v1615, 4294901760
      %1617 = vmatpush1.msra.mxu0 %v1616
      %v1618 = vand.u32 %v1137, 4294901760
      %v1619 = vsub.f32 %v1137, %v1618
      %v1620 = vand.u32 %v1619, 4294901760
      %1621 = vmatprep.subr.mxu0 %v1620
      %v1622 = vand.u32 %v1136, 4294901760
      %v1623 = vsub.f32 %v1136, %v1622
      %v1624 = vand.u32 %v1623, 4294901760
      %1625 = vmatpush1.msra.mxu0 %v1624
      %v1626 = vand.u32 %v1075, 4294901760
      %v1627 = vsub.f32 %v1075, %v1626
      %v1628 = vand.u32 %v1627, 4294901760
      %1629 = vmatprep.subr.mxu0 %v1628
      %v1630 = vand.u32 %v1074, 4294901760
      %v1631 = vsub.f32 %v1074, %v1630
      %v1632 = vand.u32 %v1631, 4294901760
      %1633 = vmatpush1.msra.mxu0 %v1632
      %v1634 = vand.u32 %v1087, 4294901760
      %v1635 = vsub.f32 %v1087, %v1634
      %v1636 = vand.u32 %v1635, 4294901760
      %1637 = vmatprep.subr.mxu0 %v1636
      %v1638 = vand.u32 %v1086, 4294901760
      %v1639 = vsub.f32 %v1086, %v1638
      %v1640 = vand.u32 %v1639, 4294901760
      %1641 = vmatpush1.msra.mxu0 %v1640
      %v1642 = vand.u32 %v1048, 4294901760
      %v1643 = vsub.f32 %v1048, %v1642
      %v1644 = vand.u32 %v1643, 4294901760
      %1645 = vmatprep.subr.mxu0 %v1644
      %v1646 = vand.u32 %v1047, 4294901760
      %v1647 = vsub.f32 %v1047, %v1646
      %v1648 = vand.u32 %v1647, 4294901760
      %1649 = vmatpush1.msra.mxu0 %v1648
      %v1650 = vand.u32 %v1105, 4294901760
      %v1651 = vsub.f32 %v1105, %v1650
      %v1652 = vand.u32 %v1651, 4294901760
      %1653 = vmatprep.subr.mxu0 %v1652
      %v1654 = vand.u32 %v1104, 4294901760
      %v1655 = vsub.f32 %v1104, %v1654
      %v1656 = vand.u32 %v1655, 4294901760
      %1657 = vmatpush1.msra.mxu0 %v1656
      %v1658 = vand.u32 %v1117, 4294901760
      %v1659 = vsub.f32 %v1117, %v1658
      %v1660 = vand.u32 %v1659, 4294901760
      %1661 = vmatprep.subr.mxu0 %v1660
      %v1662 = vand.u32 %v1116, 4294901760
      %v1663 = vsub.f32 %v1116, %v1662
      %v1664 = vand.u32 %v1663, 4294901760
      %1665 = vmatpush1.msra.mxu0 %v1664
      %v1666 = vand.u32 %v1147, 4294901760
      %v1667 = vsub.f32 %v1147, %v1666
      %v1668 = vand.u32 %v1667, 4294901760
      %1669 = vmatprep.subr.mxu0 %v1668
      %v1670 = vand.u32 %v1146, 4294901760
      %v1671 = vsub.f32 %v1146, %v1670
      %v1672 = vand.u32 %v1671, 4294901760
      %1673 = vmatpush1.msra.mxu0 %v1672
      %v1674 = vand.u32 %v1129, 4294901760
      %v1675 = vsub.f32 %v1129, %v1674
      %v1676 = vand.u32 %v1675, 4294901760
      %1677 = vmatprep.subr.mxu0 %v1676
      %v1678 = vand.u32 %v1128, 4294901760
      %v1679 = vsub.f32 %v1128, %v1678
      %v1680 = vand.u32 %v1679, 4294901760
      %1681 = vmatpush1.msra.mxu0 %v1680
      %1682 = vmatprep.subr.mxu0 0.0
      %1683 = vmatpush1.msra.mxu0 0.0
      %1684 = vmatprep.subr.mxu0 0.0
      %1685 = vmatpush1.msra.mxu0 0.0
      %1686 = vmatprep.subr.mxu0 0.0
      %1687 = vmatpush1.msra.mxu0 0.0
      %1688 = vmatprep.subr.mxu0 0.0
      %1689 = vmatpush1.msra.mxu0 0.0
      %1690 = vmatprep.subr.mxu0 0.0
      %1691 = vmatpush1.msra.mxu0 0.0
      %1692 = vmatprep.subr.mxu0 0.0
      %1693 = vmatpush1.msra.mxu0 0.0
      %1694 = vmatprep.subr.mxu0 0.0
      %1695 = vmatpush1.msra.mxu0 0.0
      %1696 = vmatprep.subr.mxu0 0.0
      %1697 = vmatpush1.msra.mxu0 0.0
      %1698 = vmatprep.subr.mxu0 0.0
      %1699 = vmatpush1.msra.mxu0 0.0
      %1700 = vmatprep.subr.mxu0 0.0
      %1701 = vmatpush1.msra.mxu0 0.0
      %1702 = vmatprep.subr.mxu0 0.0
      %1703 = vmatpush1.msra.mxu0 0.0
      %1704 = vmatprep.subr.mxu0 0.0
      %1705 = vmatpush1.msra.mxu0 0.0
      %1706 = vmatprep.subr.mxu0 0.0
      %1707 = vmatpush1.msra.mxu0 0.0
      %1708 = vmatprep.subr.mxu0 0.0
      %1709 = vmatpush1.msra.mxu0 0.0
      %1710 = vmatprep.subr.mxu0 0.0
      %1711 = vmatpush1.msra.mxu0 0.0
      %1712 = vmatprep.subr.mxu0 0.0
      %1713 = vmatpush1.msra.mxu0 0.0
      %1714 = vmatprep.subr.mxu0 0.0
      %1715 = vmatpush1.msra.mxu0 0.0
      %1716 = vmatprep.subr.mxu0 0.0
      %1717 = vmatpush1.msra.mxu0 0.0
      %1718 = vmatprep.subr.mxu0 0.0
      %1719 = vmatpush1.msra.mxu0 0.0
      %1720 = vmatprep.subr.mxu0 0.0
      %1721 = vmatpush1.msra.mxu0 0.0
      %1722 = vmatprep.subr.mxu0 0.0
      %1723 = vmatpush1.msra.mxu0 0.0
      %1724 = vmatprep.subr.mxu0 0.0
      %1725 = vmatpush1.msra.mxu0 0.0
      %1726 = vmatprep.subr.mxu0 0.0
      %1727 = vmatpush1.msra.mxu0 0.0
      %1728 = vmatprep.mubr.f32.mxu0 0.0
      %v1729 = vand.u32 %v1151, 4294901760
      %1730 = vmatmul.mubr.f32.gmra.mrb[0].mxu0 %v1729
      %v1731 = vpop.f32.mrb[0].mxu0
      %v1732 = vadd.f32 %v1606, %v1731
      %v1733 = vpop.f32.mrb[0].mxu0
      %v1734 = vadd.f32 %v1608, %v1733
      %1735 = vdwg.mxu0
      %v1736 = vand.u32 %v1063, 4294901760
      %1737 = vmatprep.subr.mxu0 %v1736
      %v1738 = vand.u32 %v1062, 4294901760
      %1739 = vmatpush1.msra.mxu0 %v1738
      %v1740 = vand.u32 %v1137, 4294901760
      %1741 = vmatprep.subr.mxu0 %v1740
      %v1742 = vand.u32 %v1136, 4294901760
      %1743 = vmatpush1.msra.mxu0 %v1742
      %v1744 = vand.u32 %v1075, 4294901760
      %1745 = vmatprep.subr.mxu0 %v1744
      %v1746 = vand.u32 %v1074, 4294901760
      %1747 = vmatpush1.msra.mxu0 %v1746
      %v1748 = vand.u32 %v1087, 4294901760
      %1749 = vmatprep.subr.mxu0 %v1748
      %v1750 = vand.u32 %v1086, 4294901760
      %1751 = vmatpush1.msra.mxu0 %v1750
      %v1752 = vand.u32 %v1048, 4294901760
      %1753 = vmatprep.subr.mxu0 %v1752
      %v1754 = vand.u32 %v1047, 4294901760
      %1755 = vmatpush1.msra.mxu0 %v1754
      %v1756 = vand.u32 %v1105, 4294901760
      %1757 = vmatprep.subr.mxu0 %v1756
      %v1758 = vand.u32 %v1104, 4294901760
      %1759 = vmatpush1.msra.mxu0 %v1758
      %v1760 = vand.u32 %v1117, 4294901760
      %1761 = vmatprep.subr.mxu0 %v1760
      %v1762 = vand.u32 %v1116, 4294901760
      %1763 = vmatpush1.msra.mxu0 %v1762
      %v1764 = vand.u32 %v1147, 4294901760
      %1765 = vmatprep.subr.mxu0 %v1764
      %v1766 = vand.u32 %v1146, 4294901760
      %1767 = vmatpush1.msra.mxu0 %v1766
      %v1768 = vand.u32 %v1129, 4294901760
      %1769 = vmatprep.subr.mxu0 %v1768
      %v1770 = vand.u32 %v1128, 4294901760
      %1771 = vmatpush1.msra.mxu0 %v1770
      %1772 = vmatprep.subr.mxu0 0.0
      %1773 = vmatpush1.msra.mxu0 0.0
      %1774 = vmatprep.subr.mxu0 0.0
      %1775 = vmatpush1.msra.mxu0 0.0
      %1776 = vmatprep.subr.mxu0 0.0
      %1777 = vmatpush1.msra.mxu0 0.0
      %1778 = vmatprep.subr.mxu0 0.0
      %1779 = vmatpush1.msra.mxu0 0.0
      %1780 = vmatprep.subr.mxu0 0.0
      %1781 = vmatpush1.msra.mxu0 0.0
      %1782 = vmatprep.subr.mxu0 0.0
      %1783 = vmatpush1.msra.mxu0 0.0
      %1784 = vmatprep.subr.mxu0 0.0
      %1785 = vmatpush1.msra.mxu0 0.0
      %1786 = vmatprep.subr.mxu0 0.0
      %1787 = vmatpush1.msra.mxu0 0.0
      %1788 = vmatprep.subr.mxu0 0.0
      %1789 = vmatpush1.msra.mxu0 0.0
      %1790 = vmatprep.subr.mxu0 0.0
      %1791 = vmatpush1.msra.mxu0 0.0
      %1792 = vmatprep.subr.mxu0 0.0
      %1793 = vmatpush1.msra.mxu0 0.0
      %1794 = vmatprep.subr.mxu0 0.0
      %1795 = vmatpush1.msra.mxu0 0.0
      %1796 = vmatprep.subr.mxu0 0.0
      %1797 = vmatpush1.msra.mxu0 0.0
      %1798 = vmatprep.subr.mxu0 0.0
      %1799 = vmatpush1.msra.mxu0 0.0
      %1800 = vmatprep.subr.mxu0 0.0
      %1801 = vmatpush1.msra.mxu0 0.0
      %1802 = vmatprep.subr.mxu0 0.0
      %1803 = vmatpush1.msra.mxu0 0.0
      %1804 = vmatprep.subr.mxu0 0.0
      %1805 = vmatpush1.msra.mxu0 0.0
      %1806 = vmatprep.subr.mxu0 0.0
      %1807 = vmatpush1.msra.mxu0 0.0
      %1808 = vmatprep.subr.mxu0 0.0
      %1809 = vmatpush1.msra.mxu0 0.0
      %1810 = vmatprep.subr.mxu0 0.0
      %1811 = vmatpush1.msra.mxu0 0.0
      %1812 = vmatprep.subr.mxu0 0.0
      %1813 = vmatpush1.msra.mxu0 0.0
      %1814 = vmatprep.subr.mxu0 0.0
      %1815 = vmatpush1.msra.mxu0 0.0
      %1816 = vmatprep.subr.mxu0 0.0
      %1817 = vmatpush1.msra.mxu0 0.0
      %1818 = vmatprep.mubr.f32.mxu0 0.0
      %v1819 = vand.u32 %v1151, 4294901760
      %1820 = vmatmul.mubr.f32.gmra.mrb[0].mxu0 %v1819
      %v1821 = vpop.f32.mrb[0].mxu0
      %v1822 = vadd.f32 %v1732, %v1821
      %v1823 = vpop.f32.mrb[0].mxu0
      %v1824 = vadd.f32 %v1734, %v1823
      %1825 = vdwg.mxu0
      %v1826 = vadd.f32 %v1822, %v1824
      %1827 = vadd.xlane.f32.xlu0 %v1826
      %v1828 = vpop.xlane.xlu0 %1827
      %v1829 = vmul.f32 %v1828, %v1023
      %v1830 = vsub.f32 %v1822, %v1829
      %v1831 = vsub.f32 %v1824, %v1829
      %v1832 = vmul.f32 %v1830, %v1830
      %v1833 = vmul.f32 %v1831, %v1831
      %v1834 = vadd.f32 %v1832, %v1833
      %1835 = vadd.xlane.f32.xlu0 %v1834
      %v1836 = vpop.xlane.xlu0 %1835
      %v1837 = vmul.f32 %v1836, %v1023
      %v1838 = vadd.f32 %v1837, 1e-05
      %v1839 = vrsqrt.pop %v1838
      %v1840 = vmul.f32 %v1830, %v1839
      %v1841 = vmul.f32 %v1831, %v1839
      %v1842 = vmax.f32 %v1840, 0.0
      %v1843 = vmax.f32 %v1841, 0.0
      %1844 = vst [vmem:[%s170] sm:$0xff] %v1842
      %1845 = vst [vmem:[%s170 + $0x8] sm:$0xff] %v1843
      %p1846 = scmp.lt.s32.totalorder %s14, 1
      %s1847 = scalar_select %p1846, %s14, 1
      %s1848 = smul.addr %s1847, 2
      %s1849 = smul.addr %s1848, 8
      %s1850 = scalar_lea.vmem %s3, %s1849
      // Predicated region
      $region33: #{unet_double_conv_forward.1} parent=31 // pred_check
        %p1851 = pneg %p100
      $region34: #{unet_double_conv_forward.1} parent=31 // pred_check_branch
        %1853 = sbr.rel (%p1851) target = $region36
      $region35: #{unet_double_conv_forward.1} parent=31 // pred_region
        _
      $region36: #{unet_double_conv_forward.1} parent=31 // pred_fallthru
        _
    $region32: #{unet_double_conv_forward.1} parent=5 // pred_fallthru
      _
    %p1854 = scmp.le.s32.totalorder 2, %s9
    // Predicated region
    $region37: #{unet_double_conv_forward.1} parent=5 // pred_check
      %p1855 = pneg %p1854
    $region38: #{unet_double_conv_forward.1} parent=5 // pred_check_branch
      %1857 = sbr.rel (%p1855) target = $region40
    $region39: #{unet_double_conv_forward.1} parent=5 // pred_region
      %s1858 = ssub.s32 %s9, 2
      // Predicated region
      $region41: #{unet_double_conv_forward.1} parent=39 // pred_check
        %p1859 = pneg %p106
      $region42: #{unet_double_conv_forward.1} parent=39 // pred_check_branch
        %1861 = sbr.rel (%p1859) target = $region44
      $region43: #{unet_double_conv_forward.1} parent=39 // pred_region
        %p1862 = scmp.lt.s32.totalorder %s15, 1
        %s1863 = scalar_select %p1862, %s15, 1
        %s1864 = smul.addr %s1863, 2
        %s1865 = smul.addr %s1864, 8
        %s1866 = scalar_lea.vmem %s3, %s1865
      $region44: #{unet_double_conv_forward.1} parent=39 // pred_fallthru
        _
    $region40: #{unet_double_conv_forward.1} parent=5 // pred_fallthru
      _
  $region6: #{unet_double_conv_forward.1} parent=0 // loop_footer
    %s13 = sadd.s32 1, %s9
  $region7: #{unet_double_conv_forward.1} parent=0 // loop_footer_branch
    %8 = sbr.rel target = $region3
  $region8: #{unet_double_conv_forward.1} parent=0 // loop_exit
    _

</llo_original>
